<compile_context>
chip_gen: v6e
topology: v6e:2x2x1
jax: 0.10.0
libtpu: 0.0.40
codegen_flags: <defaults>
</compile_context>

<pallas_src>
import functools

import jax
import jax.numpy as jnp
from jax.experimental import pallas as pl
from jax.experimental.pallas import tpu as pltpu


def _fd_conv_kernel(x_ref, w_ref, o_ref, *, M, KH, KW, TB, TH, TW, W):
    """One (batch-chunk, H-tile) grid step.

    x_ref: (TB, Hp, Wp)      padded input chunk (VMEM, full spatial extent)
    w_ref: (M, KH*KW)        FD weight table    (SMEM, scalar reads)
    o_ref: (TB, M, TH, W)    output tile        (VMEM)
    """
    h = pl.program_id(1)
    row0 = h * TH
    if TH % 8 == 0:
        row0 = pl.multiple_of(row0, 8)          # sublane-aligned window start
    THp = TH + KH - 1

    # Static loop over lane-dense W stripes (fully unrolled at trace time).
    wts = 0
    while wts < W:
        tw = min(TW, W - wts)
        twp = tw + KW - 1
        # One windowed load per stripe: dynamic (sublane) row offset from the
        # H-tile index, static lane offset.
        xw = x_ref[:, pl.ds(row0, THp), wts:wts + twp]      # (TB, THp, twp)

        # Hoist lane shifts out of the tap loop: KW column-shifted views.
        cols = [xw[:, :, j:j + tw] for j in range(KW)]      # each (TB, THp, tw)

        acc = [jnp.zeros((TB, TH, tw), jnp.float32) for _ in range(M)]
        for i in range(KH):
            for j in range(KW):
                # Sublane slice only inside the tap loop; shared across all M.
                patch = cols[j][:, i:i + TH, :].astype(jnp.float32)
                for m in range(M):
                    acc[m] = acc[m] + w_ref[m, i * KW + j] * patch

        for m in range(M):
            o_ref[:, m, :, wts:wts + tw] = acc[m].astype(o_ref.dtype)
        wts += tw


def _choose_tiles(B, H, W, Hp, Wp, M, itemsize):
    """Pick (TB, TH, TW) tile sizes per the VMEM / vreg budget."""
    # Lane-dense W stripes (multiples of 128) when W is large; else full W.
    TW = 512 if W > 512 else W
    # Sublane-aligned H tile when possible; else full H (single tile).
    TH = 8 if (H % 8 == 0 and H > 8) else H
    # Keep the per-stripe f32 accumulator (M*TB*TH*TW*4B) within ~16 vregs.
    while M * TH * TW * 4 > (64 << 10) and TW > 128 and TW % 256 == 0:
        TW //= 2
    acc_cap = max(1, (64 << 10) // max(1, M * TH * TW * 4))
    # Batch packing bounded by the (TB, Hp, Wp) input block footprint
    # (double-buffered by the auto pipeline) -> ~<= 8 MiB of input buffers.
    vmem_cap = max(1, (4 << 20) // max(1, Hp * Wp * itemsize))
    cap = min(acc_cap, vmem_cap)
    TB = 1
    for d in range(1, B + 1):
        if B % d == 0 and d <= cap:
            TB = d
    return TB, TH, TW


class FD2dPallas:
    """JAX/Pallas equivalent of `_FDNd` (dim=2) forward semantics."""

    def __init__(self, dim, kernel_size, boundary="Dirichlet"):
        assert dim == 2, "this Pallas port implements the 2-D case"
        self._dim = dim
        if isinstance(kernel_size, int):
            kernel_size = [kernel_size] * dim
        self._kernel_size = list(kernel_size)
        # Same padwidth convention as the PyTorch module (F.pad order:
        # last spatial dim first, (left, right) pairs).
        padwidth = []
        for k in reversed(self._kernel_size):
            padwidth.append((k - 1) // 2)
            padwidth.append(k - 1 - (k - 1) // 2)
        self._padwidth = padwidth
        self._boundary = boundary.upper()

    def pad(self, inputs):
        # inputs: (B, H, W).  padwidth = [wl, wr, hl, hr] (W pads first).
        wl, wr, hl, hr = self._padwidth
        pad_cfg = ((0, 0), (hl, hr), (wl, wr))
        if self._boundary == "DIRICHLET":
            return jnp.pad(inputs, pad_cfg, mode="constant", constant_values=0.0)
        elif self._boundary == "PERIODIC":
            return jnp.pad(inputs, pad_cfg, mode="wrap")
        else:
            raise ValueError(f"unknown boundary {self._boundary}")

    def conv(self, padded, kernel):
        # padded: (B, Hp, Wp);  kernel: (M, 1, KH, KW)
        B, Hp, Wp = padded.shape
        M, _, KH, KW = kernel.shape
        H, W = Hp - (KH - 1), Wp - (KW - 1)

        TB, TH, TW = _choose_tiles(B, H, W, Hp, Wp, M, padded.dtype.itemsize)
        # Flat weight table for SMEM scalar reads: w[m, i*KW + j] = k[m,0,i,j].
        w_flat = kernel.reshape(M, KH * KW).astype(jnp.float32)

        kfn = functools.partial(_fd_conv_kernel, M=M, KH=KH, KW=KW,
                                TB=TB, TH=TH, TW=TW, W=W)
        return pl.pallas_call(
            kfn,
            out_shape=jax.ShapeDtypeStruct((B, M, H, W), padded.dtype),
            grid_spec=pltpu.PrefetchScalarGridSpec(
                num_scalar_prefetch=0,
                grid=(B // TB, H // TH),
                in_specs=[
                    # Padded input: full spatial extent per batch chunk; the
                    # index map ignores the H-tile axis so the block is DMA'd
                    # once per batch chunk and reused across H tiles.
                    pl.BlockSpec((TB, Hp, Wp), lambda b, h: (b, 0, 0)),
                    # FD weights: whole table in SMEM, read as scalars.
                    pl.BlockSpec(memory_space=pltpu.MemorySpace.SMEM),
                ],
                out_specs=pl.BlockSpec((TB, M, TH, W),
                                       lambda b, h: (b, 0, h, 0)),
            ),
            compiler_params=pltpu.CompilerParams(
                dimension_semantics=("parallel", "parallel"),
                vmem_limit_bytes=32 * 1024 * 1024,
            ),
        )(padded, w_flat)

    def __call__(self, inputs, kernel):
        # forward(inputs, kernel): pad then conv — same as the PyTorch module.
        return self.conv(self.pad(inputs), kernel)


def _reference(inputs, kernel, fd):
    """Pure-JAX reference: F.conv2d(pad(inputs)[:, None], kernel)."""
    padded = fd.pad(inputs)[:, None]  # (B, 1, Hp, Wp)
    return jax.lax.conv_general_dilated(
        padded, kernel, window_strides=(1, 1), padding="VALID",
        dimension_numbers=("NCHW", "OIHW", "NCHW"))


if __name__ == "__main__":
    key = jax.random.PRNGKey(0)
    k_in, k_w = jax.random.split(key)

    B, H, W = 2, 16, 16          # batch, spatial
    KSIZE = 5                    # finite-difference kernel size
    M = 4                        # number of FD kernels (moment bank size)

    inputs = jax.random.normal(k_in, (B, H, W), dtype=jnp.float32)
    kernel = jax.random.normal(k_w, (M, 1, KSIZE, KSIZE), dtype=jnp.float32)

    fd = FD2dPallas(dim=2, kernel_size=KSIZE, boundary="Dirichlet")
    out = jax.block_until_ready(fd(inputs, kernel))
    ref = jax.block_until_ready(_reference(inputs, kernel, fd))
    assert out.shape == (B, M, H, W)
    assert jnp.allclose(out, ref, atol=1e-4, rtol=1e-4)

    # Periodic boundary path also exercised once.
    fd_p = FD2dPallas(dim=2, kernel_size=KSIZE, boundary="Periodic")
    out_p = jax.block_until_ready(fd_p(inputs, kernel))
    ref_p = jax.block_until_ready(_reference(inputs, kernel, fd_p))
    assert jnp.allclose(out_p, ref_p, atol=1e-4, rtol=1e-4)

    print("KERNEL_OK")
</pallas_src>

<mosaic_0001>
module attributes {stable_mosaic.version = 11 : i64} {
  func.func @_fd_conv_kernel(%arg0: i32, %arg1: i32, %arg2: memref<2x20x20xf32, #tpu.memory_space<vmem>>, %arg3: memref<4x25xf32, #tpu.memory_space<smem>>, %arg4: memref<2x4x8x16xf32, #tpu.memory_space<vmem>>) attributes {dimension_semantics = [#tpu.dimension_semantics<parallel>, #tpu.dimension_semantics<parallel>], iteration_bounds = array<i64: 1, 2>, scalar_prefetch = 0 : i64, scratch_operands = 0 : i64, tpu.core_type = #tpu.core_type<tc>, window_params = [{transform_indices = @transform_0, window_bounds = array<i64: 2, 20, 20>}, {transform_indices = @transform_1, window_bounds = array<i64: 4, 25>}, {transform_indices = @transform_2, window_bounds = array<i64: 2, 4, 8, 16>}]} {
    %c8_i32 = arith.constant 8 : i32
    %0 = arith.muli %arg1, %c8_i32 : i32
    %1 = tpu.assume_multiple %0, 8 : i32
    %c0 = arith.constant 0 : index
    %2 = arith.index_cast %1 : i32 to index
    %c0_0 = arith.constant 0 : index
    %3 = vector.load %arg2[%c0, %2, %c0_0] : memref<2x20x20xf32, #tpu.memory_space<vmem>>, vector<2x12x20xf32>
    %4 = vector.extract_strided_slice %3 {offsets = [0, 0, 0], sizes = [2, 12, 16], strides = [1, 1, 1]} : vector<2x12x20xf32> to vector<2x12x16xf32>
    %5 = vector.extract_strided_slice %3 {offsets = [0, 0, 1], sizes = [2, 12, 16], strides = [1, 1, 1]} : vector<2x12x20xf32> to vector<2x12x16xf32>
    %6 = vector.extract_strided_slice %3 {offsets = [0, 0, 2], sizes = [2, 12, 16], strides = [1, 1, 1]} : vector<2x12x20xf32> to vector<2x12x16xf32>
    %7 = vector.extract_strided_slice %3 {offsets = [0, 0, 3], sizes = [2, 12, 16], strides = [1, 1, 1]} : vector<2x12x20xf32> to vector<2x12x16xf32>
    %8 = vector.extract_strided_slice %3 {offsets = [0, 0, 4], sizes = [2, 12, 16], strides = [1, 1, 1]} : vector<2x12x20xf32> to vector<2x12x16xf32>
    %cst = arith.constant 0.000000e+00 : f32
    %9 = vector.broadcast %cst : f32 to vector<2x8x16xf32>
    %cst_1 = arith.constant 0.000000e+00 : f32
    %10 = vector.broadcast %cst_1 : f32 to vector<2x8x16xf32>
    %cst_2 = arith.constant 0.000000e+00 : f32
    %11 = vector.broadcast %cst_2 : f32 to vector<2x8x16xf32>
    %cst_3 = arith.constant 0.000000e+00 : f32
    %12 = vector.broadcast %cst_3 : f32 to vector<2x8x16xf32>
    %13 = vector.extract_strided_slice %4 {offsets = [0, 0, 0], sizes = [2, 8, 16], strides = [1, 1, 1]} : vector<2x12x16xf32> to vector<2x8x16xf32>
    %c0_4 = arith.constant 0 : index
    %c0_5 = arith.constant 0 : index
    %14 = memref.load %arg3[%c0_4, %c0_5] : memref<4x25xf32, #tpu.memory_space<smem>>
    %15 = vector.broadcast %14 : f32 to vector<2x8x16xf32>
    %16 = arith.mulf %15, %13 : vector<2x8x16xf32>
    %17 = arith.addf %9, %16 : vector<2x8x16xf32>
    %c1 = arith.constant 1 : index
    %c0_6 = arith.constant 0 : index
    %18 = memref.load %arg3[%c1, %c0_6] : memref<4x25xf32, #tpu.memory_space<smem>>
    %19 = vector.broadcast %18 : f32 to vector<2x8x16xf32>
    %20 = arith.mulf %19, %13 : vector<2x8x16xf32>
    %21 = arith.addf %10, %20 : vector<2x8x16xf32>
    %c2 = arith.constant 2 : index
    %c0_7 = arith.constant 0 : index
    %22 = memref.load %arg3[%c2, %c0_7] : memref<4x25xf32, #tpu.memory_space<smem>>
    %23 = vector.broadcast %22 : f32 to vector<2x8x16xf32>
    %24 = arith.mulf %23, %13 : vector<2x8x16xf32>
    %25 = arith.addf %11, %24 : vector<2x8x16xf32>
    %c3 = arith.constant 3 : index
    %c0_8 = arith.constant 0 : index
    %26 = memref.load %arg3[%c3, %c0_8] : memref<4x25xf32, #tpu.memory_space<smem>>
    %27 = vector.broadcast %26 : f32 to vector<2x8x16xf32>
    %28 = arith.mulf %27, %13 : vector<2x8x16xf32>
    %29 = arith.addf %12, %28 : vector<2x8x16xf32>
    %30 = vector.extract_strided_slice %5 {offsets = [0, 0, 0], sizes = [2, 8, 16], strides = [1, 1, 1]} : vector<2x12x16xf32> to vector<2x8x16xf32>
    %c0_9 = arith.constant 0 : index
    %c1_10 = arith.constant 1 : index
    %31 = memref.load %arg3[%c0_9, %c1_10] : memref<4x25xf32, #tpu.memory_space<smem>>
    %32 = vector.broadcast %31 : f32 to vector<2x8x16xf32>
    %33 = arith.mulf %32, %30 : vector<2x8x16xf32>
    %34 = arith.addf %17, %33 : vector<2x8x16xf32>
    %c1_11 = arith.constant 1 : index
    %c1_12 = arith.constant 1 : index
    %35 = memref.load %arg3[%c1_11, %c1_12] : memref<4x25xf32, #tpu.memory_space<smem>>
    %36 = vector.broadcast %35 : f32 to vector<2x8x16xf32>
    %37 = arith.mulf %36, %30 : vector<2x8x16xf32>
    %38 = arith.addf %21, %37 : vector<2x8x16xf32>
    %c2_13 = arith.constant 2 : index
    %c1_14 = arith.constant 1 : index
    %39 = memref.load %arg3[%c2_13, %c1_14] : memref<4x25xf32, #tpu.memory_space<smem>>
    %40 = vector.broadcast %39 : f32 to vector<2x8x16xf32>
    %41 = arith.mulf %40, %30 : vector<2x8x16xf32>
    %42 = arith.addf %25, %41 : vector<2x8x16xf32>
    %c3_15 = arith.constant 3 : index
    %c1_16 = arith.constant 1 : index
    %43 = memref.load %arg3[%c3_15, %c1_16] : memref<4x25xf32, #tpu.memory_space<smem>>
    %44 = vector.broadcast %43 : f32 to vector<2x8x16xf32>
    %45 = arith.mulf %44, %30 : vector<2x8x16xf32>
    %46 = arith.addf %29, %45 : vector<2x8x16xf32>
    %47 = vector.extract_strided_slice %6 {offsets = [0, 0, 0], sizes = [2, 8, 16], strides = [1, 1, 1]} : vector<2x12x16xf32> to vector<2x8x16xf32>
    %c0_17 = arith.constant 0 : index
    %c2_18 = arith.constant 2 : index
    %48 = memref.load %arg3[%c0_17, %c2_18] : memref<4x25xf32, #tpu.memory_space<smem>>
    %49 = vector.broadcast %48 : f32 to vector<2x8x16xf32>
    %50 = arith.mulf %49, %47 : vector<2x8x16xf32>
    %51 = arith.addf %34, %50 : vector<2x8x16xf32>
    %c1_19 = arith.constant 1 : index
    %c2_20 = arith.constant 2 : index
    %52 = memref.load %arg3[%c1_19, %c2_20] : memref<4x25xf32, #tpu.memory_space<smem>>
    %53 = vector.broadcast %52 : f32 to vector<2x8x16xf32>
    %54 = arith.mulf %53, %47 : vector<2x8x16xf32>
    %55 = arith.addf %38, %54 : vector<2x8x16xf32>
    %c2_21 = arith.constant 2 : index
    %c2_22 = arith.constant 2 : index
    %56 = memref.load %arg3[%c2_21, %c2_22] : memref<4x25xf32, #tpu.memory_space<smem>>
    %57 = vector.broadcast %56 : f32 to vector<2x8x16xf32>
    %58 = arith.mulf %57, %47 : vector<2x8x16xf32>
    %59 = arith.addf %42, %58 : vector<2x8x16xf32>
    %c3_23 = arith.constant 3 : index
    %c2_24 = arith.constant 2 : index
    %60 = memref.load %arg3[%c3_23, %c2_24] : memref<4x25xf32, #tpu.memory_space<smem>>
    %61 = vector.broadcast %60 : f32 to vector<2x8x16xf32>
    %62 = arith.mulf %61, %47 : vector<2x8x16xf32>
    %63 = arith.addf %46, %62 : vector<2x8x16xf32>
    %64 = vector.extract_strided_slice %7 {offsets = [0, 0, 0], sizes = [2, 8, 16], strides = [1, 1, 1]} : vector<2x12x16xf32> to vector<2x8x16xf32>
    %c0_25 = arith.constant 0 : index
    %c3_26 = arith.constant 3 : index
    %65 = memref.load %arg3[%c0_25, %c3_26] : memref<4x25xf32, #tpu.memory_space<smem>>
    %66 = vector.broadcast %65 : f32 to vector<2x8x16xf32>
    %67 = arith.mulf %66, %64 : vector<2x8x16xf32>
    %68 = arith.addf %51, %67 : vector<2x8x16xf32>
    %c1_27 = arith.constant 1 : index
    %c3_28 = arith.constant 3 : index
    %69 = memref.load %arg3[%c1_27, %c3_28] : memref<4x25xf32, #tpu.memory_space<smem>>
    %70 = vector.broadcast %69 : f32 to vector<2x8x16xf32>
    %71 = arith.mulf %70, %64 : vector<2x8x16xf32>
    %72 = arith.addf %55, %71 : vector<2x8x16xf32>
    %c2_29 = arith.constant 2 : index
    %c3_30 = arith.constant 3 : index
    %73 = memref.load %arg3[%c2_29, %c3_30] : memref<4x25xf32, #tpu.memory_space<smem>>
    %74 = vector.broadcast %73 : f32 to vector<2x8x16xf32>
    %75 = arith.mulf %74, %64 : vector<2x8x16xf32>
    %76 = arith.addf %59, %75 : vector<2x8x16xf32>
    %c3_31 = arith.constant 3 : index
    %c3_32 = arith.constant 3 : index
    %77 = memref.load %arg3[%c3_31, %c3_32] : memref<4x25xf32, #tpu.memory_space<smem>>
    %78 = vector.broadcast %77 : f32 to vector<2x8x16xf32>
    %79 = arith.mulf %78, %64 : vector<2x8x16xf32>
    %80 = arith.addf %63, %79 : vector<2x8x16xf32>
    %81 = vector.extract_strided_slice %8 {offsets = [0, 0, 0], sizes = [2, 8, 16], strides = [1, 1, 1]} : vector<2x12x16xf32> to vector<2x8x16xf32>
    %c0_33 = arith.constant 0 : index
    %c4 = arith.constant 4 : index
    %82 = memref.load %arg3[%c0_33, %c4] : memref<4x25xf32, #tpu.memory_space<smem>>
    %83 = vector.broadcast %82 : f32 to vector<2x8x16xf32>
    %84 = arith.mulf %83, %81 : vector<2x8x16xf32>
    %85 = arith.addf %68, %84 : vector<2x8x16xf32>
    %c1_34 = arith.constant 1 : index
    %c4_35 = arith.constant 4 : index
    %86 = memref.load %arg3[%c1_34, %c4_35] : memref<4x25xf32, #tpu.memory_space<smem>>
    %87 = vector.broadcast %86 : f32 to vector<2x8x16xf32>
    %88 = arith.mulf %87, %81 : vector<2x8x16xf32>
    %89 = arith.addf %72, %88 : vector<2x8x16xf32>
    %c2_36 = arith.constant 2 : index
    %c4_37 = arith.constant 4 : index
    %90 = memref.load %arg3[%c2_36, %c4_37] : memref<4x25xf32, #tpu.memory_space<smem>>
    %91 = vector.broadcast %90 : f32 to vector<2x8x16xf32>
    %92 = arith.mulf %91, %81 : vector<2x8x16xf32>
    %93 = arith.addf %76, %92 : vector<2x8x16xf32>
    %c3_38 = arith.constant 3 : index
    %c4_39 = arith.constant 4 : index
    %94 = memref.load %arg3[%c3_38, %c4_39] : memref<4x25xf32, #tpu.memory_space<smem>>
    %95 = vector.broadcast %94 : f32 to vector<2x8x16xf32>
    %96 = arith.mulf %95, %81 : vector<2x8x16xf32>
    %97 = arith.addf %80, %96 : vector<2x8x16xf32>
    %98 = vector.extract_strided_slice %4 {offsets = [0, 1, 0], sizes = [2, 8, 16], strides = [1, 1, 1]} : vector<2x12x16xf32> to vector<2x8x16xf32>
    %c0_40 = arith.constant 0 : index
    %c5 = arith.constant 5 : index
    %99 = memref.load %arg3[%c0_40, %c5] : memref<4x25xf32, #tpu.memory_space<smem>>
    %100 = vector.broadcast %99 : f32 to vector<2x8x16xf32>
    %101 = arith.mulf %100, %98 : vector<2x8x16xf32>
    %102 = arith.addf %85, %101 : vector<2x8x16xf32>
    %c1_41 = arith.constant 1 : index
    %c5_42 = arith.constant 5 : index
    %103 = memref.load %arg3[%c1_41, %c5_42] : memref<4x25xf32, #tpu.memory_space<smem>>
    %104 = vector.broadcast %103 : f32 to vector<2x8x16xf32>
    %105 = arith.mulf %104, %98 : vector<2x8x16xf32>
    %106 = arith.addf %89, %105 : vector<2x8x16xf32>
    %c2_43 = arith.constant 2 : index
    %c5_44 = arith.constant 5 : index
    %107 = memref.load %arg3[%c2_43, %c5_44] : memref<4x25xf32, #tpu.memory_space<smem>>
    %108 = vector.broadcast %107 : f32 to vector<2x8x16xf32>
    %109 = arith.mulf %108, %98 : vector<2x8x16xf32>
    %110 = arith.addf %93, %109 : vector<2x8x16xf32>
    %c3_45 = arith.constant 3 : index
    %c5_46 = arith.constant 5 : index
    %111 = memref.load %arg3[%c3_45, %c5_46] : memref<4x25xf32, #tpu.memory_space<smem>>
    %112 = vector.broadcast %111 : f32 to vector<2x8x16xf32>
    %113 = arith.mulf %112, %98 : vector<2x8x16xf32>
    %114 = arith.addf %97, %113 : vector<2x8x16xf32>
    %115 = vector.extract_strided_slice %5 {offsets = [0, 1, 0], sizes = [2, 8, 16], strides = [1, 1, 1]} : vector<2x12x16xf32> to vector<2x8x16xf32>
    %c0_47 = arith.constant 0 : index
    %c6 = arith.constant 6 : index
    %116 = memref.load %arg3[%c0_47, %c6] : memref<4x25xf32, #tpu.memory_space<smem>>
    %117 = vector.broadcast %116 : f32 to vector<2x8x16xf32>
    %118 = arith.mulf %117, %115 : vector<2x8x16xf32>
    %119 = arith.addf %102, %118 : vector<2x8x16xf32>
    %c1_48 = arith.constant 1 : index
    %c6_49 = arith.constant 6 : index
    %120 = memref.load %arg3[%c1_48, %c6_49] : memref<4x25xf32, #tpu.memory_space<smem>>
    %121 = vector.broadcast %120 : f32 to vector<2x8x16xf32>
    %122 = arith.mulf %121, %115 : vector<2x8x16xf32>
    %123 = arith.addf %106, %122 : vector<2x8x16xf32>
    %c2_50 = arith.constant 2 : index
    %c6_51 = arith.constant 6 : index
    %124 = memref.load %arg3[%c2_50, %c6_51] : memref<4x25xf32, #tpu.memory_space<smem>>
    %125 = vector.broadcast %124 : f32 to vector<2x8x16xf32>
    %126 = arith.mulf %125, %115 : vector<2x8x16xf32>
    %127 = arith.addf %110, %126 : vector<2x8x16xf32>
    %c3_52 = arith.constant 3 : index
    %c6_53 = arith.constant 6 : index
    %128 = memref.load %arg3[%c3_52, %c6_53] : memref<4x25xf32, #tpu.memory_space<smem>>
    %129 = vector.broadcast %128 : f32 to vector<2x8x16xf32>
    %130 = arith.mulf %129, %115 : vector<2x8x16xf32>
    %131 = arith.addf %114, %130 : vector<2x8x16xf32>
    %132 = vector.extract_strided_slice %6 {offsets = [0, 1, 0], sizes = [2, 8, 16], strides = [1, 1, 1]} : vector<2x12x16xf32> to vector<2x8x16xf32>
    %c0_54 = arith.constant 0 : index
    %c7 = arith.constant 7 : index
    %133 = memref.load %arg3[%c0_54, %c7] : memref<4x25xf32, #tpu.memory_space<smem>>
    %134 = vector.broadcast %133 : f32 to vector<2x8x16xf32>
    %135 = arith.mulf %134, %132 : vector<2x8x16xf32>
    %136 = arith.addf %119, %135 : vector<2x8x16xf32>
    %c1_55 = arith.constant 1 : index
    %c7_56 = arith.constant 7 : index
    %137 = memref.load %arg3[%c1_55, %c7_56] : memref<4x25xf32, #tpu.memory_space<smem>>
    %138 = vector.broadcast %137 : f32 to vector<2x8x16xf32>
    %139 = arith.mulf %138, %132 : vector<2x8x16xf32>
    %140 = arith.addf %123, %139 : vector<2x8x16xf32>
    %c2_57 = arith.constant 2 : index
    %c7_58 = arith.constant 7 : index
    %141 = memref.load %arg3[%c2_57, %c7_58] : memref<4x25xf32, #tpu.memory_space<smem>>
    %142 = vector.broadcast %141 : f32 to vector<2x8x16xf32>
    %143 = arith.mulf %142, %132 : vector<2x8x16xf32>
    %144 = arith.addf %127, %143 : vector<2x8x16xf32>
    %c3_59 = arith.constant 3 : index
    %c7_60 = arith.constant 7 : index
    %145 = memref.load %arg3[%c3_59, %c7_60] : memref<4x25xf32, #tpu.memory_space<smem>>
    %146 = vector.broadcast %145 : f32 to vector<2x8x16xf32>
    %147 = arith.mulf %146, %132 : vector<2x8x16xf32>
    %148 = arith.addf %131, %147 : vector<2x8x16xf32>
    %149 = vector.extract_strided_slice %7 {offsets = [0, 1, 0], sizes = [2, 8, 16], strides = [1, 1, 1]} : vector<2x12x16xf32> to vector<2x8x16xf32>
    %c0_61 = arith.constant 0 : index
    %c8 = arith.constant 8 : index
    %150 = memref.load %arg3[%c0_61, %c8] : memref<4x25xf32, #tpu.memory_space<smem>>
    %151 = vector.broadcast %150 : f32 to vector<2x8x16xf32>
    %152 = arith.mulf %151, %149 : vector<2x8x16xf32>
    %153 = arith.addf %136, %152 : vector<2x8x16xf32>
    %c1_62 = arith.constant 1 : index
    %c8_63 = arith.constant 8 : index
    %154 = memref.load %arg3[%c1_62, %c8_63] : memref<4x25xf32, #tpu.memory_space<smem>>
    %155 = vector.broadcast %154 : f32 to vector<2x8x16xf32>
    %156 = arith.mulf %155, %149 : vector<2x8x16xf32>
    %157 = arith.addf %140, %156 : vector<2x8x16xf32>
    %c2_64 = arith.constant 2 : index
    %c8_65 = arith.constant 8 : index
    %158 = memref.load %arg3[%c2_64, %c8_65] : memref<4x25xf32, #tpu.memory_space<smem>>
    %159 = vector.broadcast %158 : f32 to vector<2x8x16xf32>
    %160 = arith.mulf %159, %149 : vector<2x8x16xf32>
    %161 = arith.addf %144, %160 : vector<2x8x16xf32>
    %c3_66 = arith.constant 3 : index
    %c8_67 = arith.constant 8 : index
    %162 = memref.load %arg3[%c3_66, %c8_67] : memref<4x25xf32, #tpu.memory_space<smem>>
    %163 = vector.broadcast %162 : f32 to vector<2x8x16xf32>
    %164 = arith.mulf %163, %149 : vector<2x8x16xf32>
    %165 = arith.addf %148, %164 : vector<2x8x16xf32>
    %166 = vector.extract_strided_slice %8 {offsets = [0, 1, 0], sizes = [2, 8, 16], strides = [1, 1, 1]} : vector<2x12x16xf32> to vector<2x8x16xf32>
    %c0_68 = arith.constant 0 : index
    %c9 = arith.constant 9 : index
    %167 = memref.load %arg3[%c0_68, %c9] : memref<4x25xf32, #tpu.memory_space<smem>>
    %168 = vector.broadcast %167 : f32 to vector<2x8x16xf32>
    %169 = arith.mulf %168, %166 : vector<2x8x16xf32>
    %170 = arith.addf %153, %169 : vector<2x8x16xf32>
    %c1_69 = arith.constant 1 : index
    %c9_70 = arith.constant 9 : index
    %171 = memref.load %arg3[%c1_69, %c9_70] : memref<4x25xf32, #tpu.memory_space<smem>>
    %172 = vector.broadcast %171 : f32 to vector<2x8x16xf32>
    %173 = arith.mulf %172, %166 : vector<2x8x16xf32>
    %174 = arith.addf %157, %173 : vector<2x8x16xf32>
    %c2_71 = arith.constant 2 : index
    %c9_72 = arith.constant 9 : index
    %175 = memref.load %arg3[%c2_71, %c9_72] : memref<4x25xf32, #tpu.memory_space<smem>>
    %176 = vector.broadcast %175 : f32 to vector<2x8x16xf32>
    %177 = arith.mulf %176, %166 : vector<2x8x16xf32>
    %178 = arith.addf %161, %177 : vector<2x8x16xf32>
    %c3_73 = arith.constant 3 : index
    %c9_74 = arith.constant 9 : index
    %179 = memref.load %arg3[%c3_73, %c9_74] : memref<4x25xf32, #tpu.memory_space<smem>>
    %180 = vector.broadcast %179 : f32 to vector<2x8x16xf32>
    %181 = arith.mulf %180, %166 : vector<2x8x16xf32>
    %182 = arith.addf %165, %181 : vector<2x8x16xf32>
    %183 = vector.extract_strided_slice %4 {offsets = [0, 2, 0], sizes = [2, 8, 16], strides = [1, 1, 1]} : vector<2x12x16xf32> to vector<2x8x16xf32>
    %c0_75 = arith.constant 0 : index
    %c10 = arith.constant 10 : index
    %184 = memref.load %arg3[%c0_75, %c10] : memref<4x25xf32, #tpu.memory_space<smem>>
    %185 = vector.broadcast %184 : f32 to vector<2x8x16xf32>
    %186 = arith.mulf %185, %183 : vector<2x8x16xf32>
    %187 = arith.addf %170, %186 : vector<2x8x16xf32>
    %c1_76 = arith.constant 1 : index
    %c10_77 = arith.constant 10 : index
    %188 = memref.load %arg3[%c1_76, %c10_77] : memref<4x25xf32, #tpu.memory_space<smem>>
    %189 = vector.broadcast %188 : f32 to vector<2x8x16xf32>
    %190 = arith.mulf %189, %183 : vector<2x8x16xf32>
    %191 = arith.addf %174, %190 : vector<2x8x16xf32>
    %c2_78 = arith.constant 2 : index
    %c10_79 = arith.constant 10 : index
    %192 = memref.load %arg3[%c2_78, %c10_79] : memref<4x25xf32, #tpu.memory_space<smem>>
    %193 = vector.broadcast %192 : f32 to vector<2x8x16xf32>
    %194 = arith.mulf %193, %183 : vector<2x8x16xf32>
    %195 = arith.addf %178, %194 : vector<2x8x16xf32>
    %c3_80 = arith.constant 3 : index
    %c10_81 = arith.constant 10 : index
    %196 = memref.load %arg3[%c3_80, %c10_81] : memref<4x25xf32, #tpu.memory_space<smem>>
    %197 = vector.broadcast %196 : f32 to vector<2x8x16xf32>
    %198 = arith.mulf %197, %183 : vector<2x8x16xf32>
    %199 = arith.addf %182, %198 : vector<2x8x16xf32>
    %200 = vector.extract_strided_slice %5 {offsets = [0, 2, 0], sizes = [2, 8, 16], strides = [1, 1, 1]} : vector<2x12x16xf32> to vector<2x8x16xf32>
    %c0_82 = arith.constant 0 : index
    %c11 = arith.constant 11 : index
    %201 = memref.load %arg3[%c0_82, %c11] : memref<4x25xf32, #tpu.memory_space<smem>>
    %202 = vector.broadcast %201 : f32 to vector<2x8x16xf32>
    %203 = arith.mulf %202, %200 : vector<2x8x16xf32>
    %204 = arith.addf %187, %203 : vector<2x8x16xf32>
    %c1_83 = arith.constant 1 : index
    %c11_84 = arith.constant 11 : index
    %205 = memref.load %arg3[%c1_83, %c11_84] : memref<4x25xf32, #tpu.memory_space<smem>>
    %206 = vector.broadcast %205 : f32 to vector<2x8x16xf32>
    %207 = arith.mulf %206, %200 : vector<2x8x16xf32>
    %208 = arith.addf %191, %207 : vector<2x8x16xf32>
    %c2_85 = arith.constant 2 : index
    %c11_86 = arith.constant 11 : index
    %209 = memref.load %arg3[%c2_85, %c11_86] : memref<4x25xf32, #tpu.memory_space<smem>>
    %210 = vector.broadcast %209 : f32 to vector<2x8x16xf32>
    %211 = arith.mulf %210, %200 : vector<2x8x16xf32>
    %212 = arith.addf %195, %211 : vector<2x8x16xf32>
    %c3_87 = arith.constant 3 : index
    %c11_88 = arith.constant 11 : index
    %213 = memref.load %arg3[%c3_87, %c11_88] : memref<4x25xf32, #tpu.memory_space<smem>>
    %214 = vector.broadcast %213 : f32 to vector<2x8x16xf32>
    %215 = arith.mulf %214, %200 : vector<2x8x16xf32>
    %216 = arith.addf %199, %215 : vector<2x8x16xf32>
    %217 = vector.extract_strided_slice %6 {offsets = [0, 2, 0], sizes = [2, 8, 16], strides = [1, 1, 1]} : vector<2x12x16xf32> to vector<2x8x16xf32>
    %c0_89 = arith.constant 0 : index
    %c12 = arith.constant 12 : index
    %218 = memref.load %arg3[%c0_89, %c12] : memref<4x25xf32, #tpu.memory_space<smem>>
    %219 = vector.broadcast %218 : f32 to vector<2x8x16xf32>
    %220 = arith.mulf %219, %217 : vector<2x8x16xf32>
    %221 = arith.addf %204, %220 : vector<2x8x16xf32>
    %c1_90 = arith.constant 1 : index
    %c12_91 = arith.constant 12 : index
    %222 = memref.load %arg3[%c1_90, %c12_91] : memref<4x25xf32, #tpu.memory_space<smem>>
    %223 = vector.broadcast %222 : f32 to vector<2x8x16xf32>
    %224 = arith.mulf %223, %217 : vector<2x8x16xf32>
    %225 = arith.addf %208, %224 : vector<2x8x16xf32>
    %c2_92 = arith.constant 2 : index
    %c12_93 = arith.constant 12 : index
    %226 = memref.load %arg3[%c2_92, %c12_93] : memref<4x25xf32, #tpu.memory_space<smem>>
    %227 = vector.broadcast %226 : f32 to vector<2x8x16xf32>
    %228 = arith.mulf %227, %217 : vector<2x8x16xf32>
    %229 = arith.addf %212, %228 : vector<2x8x16xf32>
    %c3_94 = arith.constant 3 : index
    %c12_95 = arith.constant 12 : index
    %230 = memref.load %arg3[%c3_94, %c12_95] : memref<4x25xf32, #tpu.memory_space<smem>>
    %231 = vector.broadcast %230 : f32 to vector<2x8x16xf32>
    %232 = arith.mulf %231, %217 : vector<2x8x16xf32>
    %233 = arith.addf %216, %232 : vector<2x8x16xf32>
    %234 = vector.extract_strided_slice %7 {offsets = [0, 2, 0], sizes = [2, 8, 16], strides = [1, 1, 1]} : vector<2x12x16xf32> to vector<2x8x16xf32>
    %c0_96 = arith.constant 0 : index
    %c13 = arith.constant 13 : index
    %235 = memref.load %arg3[%c0_96, %c13] : memref<4x25xf32, #tpu.memory_space<smem>>
    %236 = vector.broadcast %235 : f32 to vector<2x8x16xf32>
    %237 = arith.mulf %236, %234 : vector<2x8x16xf32>
    %238 = arith.addf %221, %237 : vector<2x8x16xf32>
    %c1_97 = arith.constant 1 : index
    %c13_98 = arith.constant 13 : index
    %239 = memref.load %arg3[%c1_97, %c13_98] : memref<4x25xf32, #tpu.memory_space<smem>>
    %240 = vector.broadcast %239 : f32 to vector<2x8x16xf32>
    %241 = arith.mulf %240, %234 : vector<2x8x16xf32>
    %242 = arith.addf %225, %241 : vector<2x8x16xf32>
    %c2_99 = arith.constant 2 : index
    %c13_100 = arith.constant 13 : index
    %243 = memref.load %arg3[%c2_99, %c13_100] : memref<4x25xf32, #tpu.memory_space<smem>>
    %244 = vector.broadcast %243 : f32 to vector<2x8x16xf32>
    %245 = arith.mulf %244, %234 : vector<2x8x16xf32>
    %246 = arith.addf %229, %245 : vector<2x8x16xf32>
    %c3_101 = arith.constant 3 : index
    %c13_102 = arith.constant 13 : index
    %247 = memref.load %arg3[%c3_101, %c13_102] : memref<4x25xf32, #tpu.memory_space<smem>>
    %248 = vector.broadcast %247 : f32 to vector<2x8x16xf32>
    %249 = arith.mulf %248, %234 : vector<2x8x16xf32>
    %250 = arith.addf %233, %249 : vector<2x8x16xf32>
    %251 = vector.extract_strided_slice %8 {offsets = [0, 2, 0], sizes = [2, 8, 16], strides = [1, 1, 1]} : vector<2x12x16xf32> to vector<2x8x16xf32>
    %c0_103 = arith.constant 0 : index
    %c14 = arith.constant 14 : index
    %252 = memref.load %arg3[%c0_103, %c14] : memref<4x25xf32, #tpu.memory_space<smem>>
    %253 = vector.broadcast %252 : f32 to vector<2x8x16xf32>
    %254 = arith.mulf %253, %251 : vector<2x8x16xf32>
    %255 = arith.addf %238, %254 : vector<2x8x16xf32>
    %c1_104 = arith.constant 1 : index
    %c14_105 = arith.constant 14 : index
    %256 = memref.load %arg3[%c1_104, %c14_105] : memref<4x25xf32, #tpu.memory_space<smem>>
    %257 = vector.broadcast %256 : f32 to vector<2x8x16xf32>
    %258 = arith.mulf %257, %251 : vector<2x8x16xf32>
    %259 = arith.addf %242, %258 : vector<2x8x16xf32>
    %c2_106 = arith.constant 2 : index
    %c14_107 = arith.constant 14 : index
    %260 = memref.load %arg3[%c2_106, %c14_107] : memref<4x25xf32, #tpu.memory_space<smem>>
    %261 = vector.broadcast %260 : f32 to vector<2x8x16xf32>
    %262 = arith.mulf %261, %251 : vector<2x8x16xf32>
    %263 = arith.addf %246, %262 : vector<2x8x16xf32>
    %c3_108 = arith.constant 3 : index
    %c14_109 = arith.constant 14 : index
    %264 = memref.load %arg3[%c3_108, %c14_109] : memref<4x25xf32, #tpu.memory_space<smem>>
    %265 = vector.broadcast %264 : f32 to vector<2x8x16xf32>
    %266 = arith.mulf %265, %251 : vector<2x8x16xf32>
    %267 = arith.addf %250, %266 : vector<2x8x16xf32>
    %268 = vector.extract_strided_slice %4 {offsets = [0, 3, 0], sizes = [2, 8, 16], strides = [1, 1, 1]} : vector<2x12x16xf32> to vector<2x8x16xf32>
    %c0_110 = arith.constant 0 : index
    %c15 = arith.constant 15 : index
    %269 = memref.load %arg3[%c0_110, %c15] : memref<4x25xf32, #tpu.memory_space<smem>>
    %270 = vector.broadcast %269 : f32 to vector<2x8x16xf32>
    %271 = arith.mulf %270, %268 : vector<2x8x16xf32>
    %272 = arith.addf %255, %271 : vector<2x8x16xf32>
    %c1_111 = arith.constant 1 : index
    %c15_112 = arith.constant 15 : index
    %273 = memref.load %arg3[%c1_111, %c15_112] : memref<4x25xf32, #tpu.memory_space<smem>>
    %274 = vector.broadcast %273 : f32 to vector<2x8x16xf32>
    %275 = arith.mulf %274, %268 : vector<2x8x16xf32>
    %276 = arith.addf %259, %275 : vector<2x8x16xf32>
    %c2_113 = arith.constant 2 : index
    %c15_114 = arith.constant 15 : index
    %277 = memref.load %arg3[%c2_113, %c15_114] : memref<4x25xf32, #tpu.memory_space<smem>>
    %278 = vector.broadcast %277 : f32 to vector<2x8x16xf32>
    %279 = arith.mulf %278, %268 : vector<2x8x16xf32>
    %280 = arith.addf %263, %279 : vector<2x8x16xf32>
    %c3_115 = arith.constant 3 : index
    %c15_116 = arith.constant 15 : index
    %281 = memref.load %arg3[%c3_115, %c15_116] : memref<4x25xf32, #tpu.memory_space<smem>>
    %282 = vector.broadcast %281 : f32 to vector<2x8x16xf32>
    %283 = arith.mulf %282, %268 : vector<2x8x16xf32>
    %284 = arith.addf %267, %283 : vector<2x8x16xf32>
    %285 = vector.extract_strided_slice %5 {offsets = [0, 3, 0], sizes = [2, 8, 16], strides = [1, 1, 1]} : vector<2x12x16xf32> to vector<2x8x16xf32>
    %c0_117 = arith.constant 0 : index
    %c16 = arith.constant 16 : index
    %286 = memref.load %arg3[%c0_117, %c16] : memref<4x25xf32, #tpu.memory_space<smem>>
    %287 = vector.broadcast %286 : f32 to vector<2x8x16xf32>
    %288 = arith.mulf %287, %285 : vector<2x8x16xf32>
    %289 = arith.addf %272, %288 : vector<2x8x16xf32>
    %c1_118 = arith.constant 1 : index
    %c16_119 = arith.constant 16 : index
    %290 = memref.load %arg3[%c1_118, %c16_119] : memref<4x25xf32, #tpu.memory_space<smem>>
    %291 = vector.broadcast %290 : f32 to vector<2x8x16xf32>
    %292 = arith.mulf %291, %285 : vector<2x8x16xf32>
    %293 = arith.addf %276, %292 : vector<2x8x16xf32>
    %c2_120 = arith.constant 2 : index
    %c16_121 = arith.constant 16 : index
    %294 = memref.load %arg3[%c2_120, %c16_121] : memref<4x25xf32, #tpu.memory_space<smem>>
    %295 = vector.broadcast %294 : f32 to vector<2x8x16xf32>
    %296 = arith.mulf %295, %285 : vector<2x8x16xf32>
    %297 = arith.addf %280, %296 : vector<2x8x16xf32>
    %c3_122 = arith.constant 3 : index
    %c16_123 = arith.constant 16 : index
    %298 = memref.load %arg3[%c3_122, %c16_123] : memref<4x25xf32, #tpu.memory_space<smem>>
    %299 = vector.broadcast %298 : f32 to vector<2x8x16xf32>
    %300 = arith.mulf %299, %285 : vector<2x8x16xf32>
    %301 = arith.addf %284, %300 : vector<2x8x16xf32>
    %302 = vector.extract_strided_slice %6 {offsets = [0, 3, 0], sizes = [2, 8, 16], strides = [1, 1, 1]} : vector<2x12x16xf32> to vector<2x8x16xf32>
    %c0_124 = arith.constant 0 : index
    %c17 = arith.constant 17 : index
    %303 = memref.load %arg3[%c0_124, %c17] : memref<4x25xf32, #tpu.memory_space<smem>>
    %304 = vector.broadcast %303 : f32 to vector<2x8x16xf32>
    %305 = arith.mulf %304, %302 : vector<2x8x16xf32>
    %306 = arith.addf %289, %305 : vector<2x8x16xf32>
    %c1_125 = arith.constant 1 : index
    %c17_126 = arith.constant 17 : index
    %307 = memref.load %arg3[%c1_125, %c17_126] : memref<4x25xf32, #tpu.memory_space<smem>>
    %308 = vector.broadcast %307 : f32 to vector<2x8x16xf32>
    %309 = arith.mulf %308, %302 : vector<2x8x16xf32>
    %310 = arith.addf %293, %309 : vector<2x8x16xf32>
    %c2_127 = arith.constant 2 : index
    %c17_128 = arith.constant 17 : index
    %311 = memref.load %arg3[%c2_127, %c17_128] : memref<4x25xf32, #tpu.memory_space<smem>>
    %312 = vector.broadcast %311 : f32 to vector<2x8x16xf32>
    %313 = arith.mulf %312, %302 : vector<2x8x16xf32>
    %314 = arith.addf %297, %313 : vector<2x8x16xf32>
    %c3_129 = arith.constant 3 : index
    %c17_130 = arith.constant 17 : index
    %315 = memref.load %arg3[%c3_129, %c17_130] : memref<4x25xf32, #tpu.memory_space<smem>>
    %316 = vector.broadcast %315 : f32 to vector<2x8x16xf32>
    %317 = arith.mulf %316, %302 : vector<2x8x16xf32>
    %318 = arith.addf %301, %317 : vector<2x8x16xf32>
    %319 = vector.extract_strided_slice %7 {offsets = [0, 3, 0], sizes = [2, 8, 16], strides = [1, 1, 1]} : vector<2x12x16xf32> to vector<2x8x16xf32>
    %c0_131 = arith.constant 0 : index
    %c18 = arith.constant 18 : index
    %320 = memref.load %arg3[%c0_131, %c18] : memref<4x25xf32, #tpu.memory_space<smem>>
    %321 = vector.broadcast %320 : f32 to vector<2x8x16xf32>
    %322 = arith.mulf %321, %319 : vector<2x8x16xf32>
    %323 = arith.addf %306, %322 : vector<2x8x16xf32>
    %c1_132 = arith.constant 1 : index
    %c18_133 = arith.constant 18 : index
    %324 = memref.load %arg3[%c1_132, %c18_133] : memref<4x25xf32, #tpu.memory_space<smem>>
    %325 = vector.broadcast %324 : f32 to vector<2x8x16xf32>
    %326 = arith.mulf %325, %319 : vector<2x8x16xf32>
    %327 = arith.addf %310, %326 : vector<2x8x16xf32>
    %c2_134 = arith.constant 2 : index
    %c18_135 = arith.constant 18 : index
    %328 = memref.load %arg3[%c2_134, %c18_135] : memref<4x25xf32, #tpu.memory_space<smem>>
    %329 = vector.broadcast %328 : f32 to vector<2x8x16xf32>
    %330 = arith.mulf %329, %319 : vector<2x8x16xf32>
    %331 = arith.addf %314, %330 : vector<2x8x16xf32>
    %c3_136 = arith.constant 3 : index
    %c18_137 = arith.constant 18 : index
    %332 = memref.load %arg3[%c3_136, %c18_137] : memref<4x25xf32, #tpu.memory_space<smem>>
    %333 = vector.broadcast %332 : f32 to vector<2x8x16xf32>
    %334 = arith.mulf %333, %319 : vector<2x8x16xf32>
    %335 = arith.addf %318, %334 : vector<2x8x16xf32>
    %336 = vector.extract_strided_slice %8 {offsets = [0, 3, 0], sizes = [2, 8, 16], strides = [1, 1, 1]} : vector<2x12x16xf32> to vector<2x8x16xf32>
    %c0_138 = arith.constant 0 : index
    %c19 = arith.constant 19 : index
    %337 = memref.load %arg3[%c0_138, %c19] : memref<4x25xf32, #tpu.memory_space<smem>>
    %338 = vector.broadcast %337 : f32 to vector<2x8x16xf32>
    %339 = arith.mulf %338, %336 : vector<2x8x16xf32>
    %340 = arith.addf %323, %339 : vector<2x8x16xf32>
    %c1_139 = arith.constant 1 : index
    %c19_140 = arith.constant 19 : index
    %341 = memref.load %arg3[%c1_139, %c19_140] : memref<4x25xf32, #tpu.memory_space<smem>>
    %342 = vector.broadcast %341 : f32 to vector<2x8x16xf32>
    %343 = arith.mulf %342, %336 : vector<2x8x16xf32>
    %344 = arith.addf %327, %343 : vector<2x8x16xf32>
    %c2_141 = arith.constant 2 : index
    %c19_142 = arith.constant 19 : index
    %345 = memref.load %arg3[%c2_141, %c19_142] : memref<4x25xf32, #tpu.memory_space<smem>>
    %346 = vector.broadcast %345 : f32 to vector<2x8x16xf32>
    %347 = arith.mulf %346, %336 : vector<2x8x16xf32>
    %348 = arith.addf %331, %347 : vector<2x8x16xf32>
    %c3_143 = arith.constant 3 : index
    %c19_144 = arith.constant 19 : index
    %349 = memref.load %arg3[%c3_143, %c19_144] : memref<4x25xf32, #tpu.memory_space<smem>>
    %350 = vector.broadcast %349 : f32 to vector<2x8x16xf32>
    %351 = arith.mulf %350, %336 : vector<2x8x16xf32>
    %352 = arith.addf %335, %351 : vector<2x8x16xf32>
    %353 = vector.extract_strided_slice %4 {offsets = [0, 4, 0], sizes = [2, 8, 16], strides = [1, 1, 1]} : vector<2x12x16xf32> to vector<2x8x16xf32>
    %c0_145 = arith.constant 0 : index
    %c20 = arith.constant 20 : index
    %354 = memref.load %arg3[%c0_145, %c20] : memref<4x25xf32, #tpu.memory_space<smem>>
    %355 = vector.broadcast %354 : f32 to vector<2x8x16xf32>
    %356 = arith.mulf %355, %353 : vector<2x8x16xf32>
    %357 = arith.addf %340, %356 : vector<2x8x16xf32>
    %c1_146 = arith.constant 1 : index
    %c20_147 = arith.constant 20 : index
    %358 = memref.load %arg3[%c1_146, %c20_147] : memref<4x25xf32, #tpu.memory_space<smem>>
    %359 = vector.broadcast %358 : f32 to vector<2x8x16xf32>
    %360 = arith.mulf %359, %353 : vector<2x8x16xf32>
    %361 = arith.addf %344, %360 : vector<2x8x16xf32>
    %c2_148 = arith.constant 2 : index
    %c20_149 = arith.constant 20 : index
    %362 = memref.load %arg3[%c2_148, %c20_149] : memref<4x25xf32, #tpu.memory_space<smem>>
    %363 = vector.broadcast %362 : f32 to vector<2x8x16xf32>
    %364 = arith.mulf %363, %353 : vector<2x8x16xf32>
    %365 = arith.addf %348, %364 : vector<2x8x16xf32>
    %c3_150 = arith.constant 3 : index
    %c20_151 = arith.constant 20 : index
    %366 = memref.load %arg3[%c3_150, %c20_151] : memref<4x25xf32, #tpu.memory_space<smem>>
    %367 = vector.broadcast %366 : f32 to vector<2x8x16xf32>
    %368 = arith.mulf %367, %353 : vector<2x8x16xf32>
    %369 = arith.addf %352, %368 : vector<2x8x16xf32>
    %370 = vector.extract_strided_slice %5 {offsets = [0, 4, 0], sizes = [2, 8, 16], strides = [1, 1, 1]} : vector<2x12x16xf32> to vector<2x8x16xf32>
    %c0_152 = arith.constant 0 : index
    %c21 = arith.constant 21 : index
    %371 = memref.load %arg3[%c0_152, %c21] : memref<4x25xf32, #tpu.memory_space<smem>>
    %372 = vector.broadcast %371 : f32 to vector<2x8x16xf32>
    %373 = arith.mulf %372, %370 : vector<2x8x16xf32>
    %374 = arith.addf %357, %373 : vector<2x8x16xf32>
    %c1_153 = arith.constant 1 : index
    %c21_154 = arith.constant 21 : index
    %375 = memref.load %arg3[%c1_153, %c21_154] : memref<4x25xf32, #tpu.memory_space<smem>>
    %376 = vector.broadcast %375 : f32 to vector<2x8x16xf32>
    %377 = arith.mulf %376, %370 : vector<2x8x16xf32>
    %378 = arith.addf %361, %377 : vector<2x8x16xf32>
    %c2_155 = arith.constant 2 : index
    %c21_156 = arith.constant 21 : index
    %379 = memref.load %arg3[%c2_155, %c21_156] : memref<4x25xf32, #tpu.memory_space<smem>>
    %380 = vector.broadcast %379 : f32 to vector<2x8x16xf32>
    %381 = arith.mulf %380, %370 : vector<2x8x16xf32>
    %382 = arith.addf %365, %381 : vector<2x8x16xf32>
    %c3_157 = arith.constant 3 : index
    %c21_158 = arith.constant 21 : index
    %383 = memref.load %arg3[%c3_157, %c21_158] : memref<4x25xf32, #tpu.memory_space<smem>>
    %384 = vector.broadcast %383 : f32 to vector<2x8x16xf32>
    %385 = arith.mulf %384, %370 : vector<2x8x16xf32>
    %386 = arith.addf %369, %385 : vector<2x8x16xf32>
    %387 = vector.extract_strided_slice %6 {offsets = [0, 4, 0], sizes = [2, 8, 16], strides = [1, 1, 1]} : vector<2x12x16xf32> to vector<2x8x16xf32>
    %c0_159 = arith.constant 0 : index
    %c22 = arith.constant 22 : index
    %388 = memref.load %arg3[%c0_159, %c22] : memref<4x25xf32, #tpu.memory_space<smem>>
    %389 = vector.broadcast %388 : f32 to vector<2x8x16xf32>
    %390 = arith.mulf %389, %387 : vector<2x8x16xf32>
    %391 = arith.addf %374, %390 : vector<2x8x16xf32>
    %c1_160 = arith.constant 1 : index
    %c22_161 = arith.constant 22 : index
    %392 = memref.load %arg3[%c1_160, %c22_161] : memref<4x25xf32, #tpu.memory_space<smem>>
    %393 = vector.broadcast %392 : f32 to vector<2x8x16xf32>
    %394 = arith.mulf %393, %387 : vector<2x8x16xf32>
    %395 = arith.addf %378, %394 : vector<2x8x16xf32>
    %c2_162 = arith.constant 2 : index
    %c22_163 = arith.constant 22 : index
    %396 = memref.load %arg3[%c2_162, %c22_163] : memref<4x25xf32, #tpu.memory_space<smem>>
    %397 = vector.broadcast %396 : f32 to vector<2x8x16xf32>
    %398 = arith.mulf %397, %387 : vector<2x8x16xf32>
    %399 = arith.addf %382, %398 : vector<2x8x16xf32>
    %c3_164 = arith.constant 3 : index
    %c22_165 = arith.constant 22 : index
    %400 = memref.load %arg3[%c3_164, %c22_165] : memref<4x25xf32, #tpu.memory_space<smem>>
    %401 = vector.broadcast %400 : f32 to vector<2x8x16xf32>
    %402 = arith.mulf %401, %387 : vector<2x8x16xf32>
    %403 = arith.addf %386, %402 : vector<2x8x16xf32>
    %404 = vector.extract_strided_slice %7 {offsets = [0, 4, 0], sizes = [2, 8, 16], strides = [1, 1, 1]} : vector<2x12x16xf32> to vector<2x8x16xf32>
    %c0_166 = arith.constant 0 : index
    %c23 = arith.constant 23 : index
    %405 = memref.load %arg3[%c0_166, %c23] : memref<4x25xf32, #tpu.memory_space<smem>>
    %406 = vector.broadcast %405 : f32 to vector<2x8x16xf32>
    %407 = arith.mulf %406, %404 : vector<2x8x16xf32>
    %408 = arith.addf %391, %407 : vector<2x8x16xf32>
    %c1_167 = arith.constant 1 : index
    %c23_168 = arith.constant 23 : index
    %409 = memref.load %arg3[%c1_167, %c23_168] : memref<4x25xf32, #tpu.memory_space<smem>>
    %410 = vector.broadcast %409 : f32 to vector<2x8x16xf32>
    %411 = arith.mulf %410, %404 : vector<2x8x16xf32>
    %412 = arith.addf %395, %411 : vector<2x8x16xf32>
    %c2_169 = arith.constant 2 : index
    %c23_170 = arith.constant 23 : index
    %413 = memref.load %arg3[%c2_169, %c23_170] : memref<4x25xf32, #tpu.memory_space<smem>>
    %414 = vector.broadcast %413 : f32 to vector<2x8x16xf32>
    %415 = arith.mulf %414, %404 : vector<2x8x16xf32>
    %416 = arith.addf %399, %415 : vector<2x8x16xf32>
    %c3_171 = arith.constant 3 : index
    %c23_172 = arith.constant 23 : index
    %417 = memref.load %arg3[%c3_171, %c23_172] : memref<4x25xf32, #tpu.memory_space<smem>>
    %418 = vector.broadcast %417 : f32 to vector<2x8x16xf32>
    %419 = arith.mulf %418, %404 : vector<2x8x16xf32>
    %420 = arith.addf %403, %419 : vector<2x8x16xf32>
    %421 = vector.extract_strided_slice %8 {offsets = [0, 4, 0], sizes = [2, 8, 16], strides = [1, 1, 1]} : vector<2x12x16xf32> to vector<2x8x16xf32>
    %c0_173 = arith.constant 0 : index
    %c24 = arith.constant 24 : index
    %422 = memref.load %arg3[%c0_173, %c24] : memref<4x25xf32, #tpu.memory_space<smem>>
    %423 = vector.broadcast %422 : f32 to vector<2x8x16xf32>
    %424 = arith.mulf %423, %421 : vector<2x8x16xf32>
    %425 = arith.addf %408, %424 : vector<2x8x16xf32>
    %c1_174 = arith.constant 1 : index
    %c24_175 = arith.constant 24 : index
    %426 = memref.load %arg3[%c1_174, %c24_175] : memref<4x25xf32, #tpu.memory_space<smem>>
    %427 = vector.broadcast %426 : f32 to vector<2x8x16xf32>
    %428 = arith.mulf %427, %421 : vector<2x8x16xf32>
    %429 = arith.addf %412, %428 : vector<2x8x16xf32>
    %c2_176 = arith.constant 2 : index
    %c24_177 = arith.constant 24 : index
    %430 = memref.load %arg3[%c2_176, %c24_177] : memref<4x25xf32, #tpu.memory_space<smem>>
    %431 = vector.broadcast %430 : f32 to vector<2x8x16xf32>
    %432 = arith.mulf %431, %421 : vector<2x8x16xf32>
    %433 = arith.addf %416, %432 : vector<2x8x16xf32>
    %c3_178 = arith.constant 3 : index
    %c24_179 = arith.constant 24 : index
    %434 = memref.load %arg3[%c3_178, %c24_179] : memref<4x25xf32, #tpu.memory_space<smem>>
    %435 = vector.broadcast %434 : f32 to vector<2x8x16xf32>
    %436 = arith.mulf %435, %421 : vector<2x8x16xf32>
    %437 = arith.addf %420, %436 : vector<2x8x16xf32>
    %c0_180 = arith.constant 0 : index
    %c0_181 = arith.constant 0 : index
    %c0_182 = arith.constant 0 : index
    %c0_183 = arith.constant 0 : index
    %438 = vector.load %arg4[%c0_180, %c0_181, %c0_182, %c0_183] : memref<2x4x8x16xf32, #tpu.memory_space<vmem>>, vector<2x1x8x16xf32>
    %439 = vector.shape_cast %438 : vector<2x1x8x16xf32> to vector<2x8x16xf32>
    %440 = vector.shape_cast %425 : vector<2x8x16xf32> to vector<2x1x8x16xf32>
    tpu.vector_store %arg4[%c0_180, %c0_181, %c0_182, %c0_183], %440 {strides = array<i32>} : memref<2x4x8x16xf32, #tpu.memory_space<vmem>>, vector<2x1x8x16xf32>,
    %c0_184 = arith.constant 0 : index
    %c1_185 = arith.constant 1 : index
    %c0_186 = arith.constant 0 : index
    %c0_187 = arith.constant 0 : index
    %441 = vector.load %arg4[%c0_184, %c1_185, %c0_186, %c0_187] : memref<2x4x8x16xf32, #tpu.memory_space<vmem>>, vector<2x1x8x16xf32>
    %442 = vector.shape_cast %441 : vector<2x1x8x16xf32> to vector<2x8x16xf32>
    %443 = vector.shape_cast %429 : vector<2x8x16xf32> to vector<2x1x8x16xf32>
    tpu.vector_store %arg4[%c0_184, %c1_185, %c0_186, %c0_187], %443 {strides = array<i32>} : memref<2x4x8x16xf32, #tpu.memory_space<vmem>>, vector<2x1x8x16xf32>,
    %c0_188 = arith.constant 0 : index
    %c2_189 = arith.constant 2 : index
    %c0_190 = arith.constant 0 : index
    %c0_191 = arith.constant 0 : index
    %444 = vector.load %arg4[%c0_188, %c2_189, %c0_190, %c0_191] : memref<2x4x8x16xf32, #tpu.memory_space<vmem>>, vector<2x1x8x16xf32>
    %445 = vector.shape_cast %444 : vector<2x1x8x16xf32> to vector<2x8x16xf32>
    %446 = vector.shape_cast %433 : vector<2x8x16xf32> to vector<2x1x8x16xf32>
    tpu.vector_store %arg4[%c0_188, %c2_189, %c0_190, %c0_191], %446 {strides = array<i32>} : memref<2x4x8x16xf32, #tpu.memory_space<vmem>>, vector<2x1x8x16xf32>,
    %c0_192 = arith.constant 0 : index
    %c3_193 = arith.constant 3 : index
    %c0_194 = arith.constant 0 : index
    %c0_195 = arith.constant 0 : index
    %447 = vector.load %arg4[%c0_192, %c3_193, %c0_194, %c0_195] : memref<2x4x8x16xf32, #tpu.memory_space<vmem>>, vector<2x1x8x16xf32>
    %448 = vector.shape_cast %447 : vector<2x1x8x16xf32> to vector<2x8x16xf32>
    %449 = vector.shape_cast %437 : vector<2x8x16xf32> to vector<2x1x8x16xf32>
    tpu.vector_store %arg4[%c0_192, %c3_193, %c0_194, %c0_195], %449 {strides = array<i32>} : memref<2x4x8x16xf32, #tpu.memory_space<vmem>>, vector<2x1x8x16xf32>,
    return
  }
  func.func @transform_0(%arg0: i32, %arg1: i32) -> (i32, i32, i32) {
    %c0_i32 = arith.constant 0 : i32
    %c0_i32_0 = arith.constant 0 : i32
    %c0_i32_1 = arith.constant 0 : i32
    return %arg0, %c0_i32, %c0_i32_0 : i32, i32, i32
  }
  func.func @transform_1(%arg0: i32, %arg1: i32) -> (i32, i32) {
    %c0_i32 = arith.constant 0 : i32
    %c0_i32_0 = arith.constant 0 : i32
    %c0_i32_1 = arith.constant 0 : i32
    return %c0_i32, %c0_i32_0 : i32, i32
  }
  func.func @transform_2(%arg0: i32, %arg1: i32) -> (i32, i32, i32, i32) {
    %c0_i32 = arith.constant 0 : i32
    %c0_i32_0 = arith.constant 0 : i32
    %c0_i32_1 = arith.constant 0 : i32
    return %arg0, %c0_i32, %arg1, %c0_i32_0 : i32, i32, i32, i32
  }
}

</mosaic_0001>

<llo_original>
// kernel: tpu_custom_call.1
$region0: #{tpu_custom_call.1}
  #allocation0 [shape = 'u32[]', space=smem, size = 0x4, offset = 0x4, fixed_abs, tag = 'smem constant byte address 0x4 - core index']
  #allocation1 [shape = 'u32[144,128]{1,0:T(1,128)}', space=vmem, size = 0x12000, scoped, tag = 'internal scratch']
  %s0 = inlined_call_operand.vmem [shape: f32[2,20,20], index: 0, kind: input, shape index: {}]
  %s1 = inlined_call_operand.vmem [shape: f32[4,25], index: 1, kind: input, shape index: {}]
  %s2 = inlined_call_operand.hbm [shape: f32[2,4,16,16], index: 2, kind: output, shape index: {}]
  %s3 = sld [smem:[#allocation0]]
  $region45: #{tpu_custom_call.1} parent=0
    _
  %s5 = ssub.s32 1, %s3
  %s6 = scalar_select 0, %s5, %s3
  $region1: #{tpu_custom_call.1} parent=0
    #allocation2 [shape = 'u8[2048]{0}', space=smem, size = 0x800, scoped, tag = 'input window, operand 1, single buffered']
    #allocation3 [shape = 's32[2]{0}', space=sflag, size = 0x8, scoped, tag = 'scoped memory for tpu_custom_call.1']
    #allocation4 [shape = 's32[2]{0}', space=sflag, size = 0x8, scoped, tag = 'scoped memory for tpu_custom_call.1']
    #allocation5 [shape = 'u8[65536]{0}', space=vmem, size = 0x10000, scoped, tag = 'output window, operand 0']
    %7 = vsyncpa [#allocation4], 0
    %8 = vsyncpa [#allocation3], 0
    %s9 = scalar_lea.sflag [#allocation3], 1
    %10 = vsyncpa %s9, 0
    loop: start=0, step=1, limit=4
    $region2: #{tpu_custom_call.1} parent=1 // loop_pre_header
      _
    $region3: #{tpu_custom_call.1} parent=1 // loop_header
      %s12 = sphi 0, %s16
      %p13 = scmp.ge.s32.totalorder %s12, 4
      %s19 = sphi 0, %s31
      %s20 = sphi 0, %s27
      %s21 = sphi 0, %s19
      %s22 = sphi 0, %s20
      %s23 = sphi 0, %s21
      %s24 = sphi 0, %s22
      %s34 = sphi 0, %s36
      %s37 = sphi 0, %s34
      %s38 = sphi 0, %s37
      %s54 = sphi 0, %s38
      %s58 = sphi 0, %s58
      %s60 = sphi 0, %s58
      %s61 = sphi 0, %s60
      %s75 = sphi 0, %s61
      %s83 = sphi 0, %s85
      %s86 = sphi 0, %s83
      %s87 = sphi 0, %s86
      %s103 = sphi 0, %s87
    $region4: #{tpu_custom_call.1} parent=1 // loop_header_branch
      %15 = sbr.rel (%p13) target = $region8
    $region5: #{tpu_custom_call.1} parent=1 // loop_body
      %s17 = ssub.s32 %s12, 1
      %s18 = ssub.s32 %s12, 2
      %s25 = sadd.s32 1, %s20
      %p26 = scmp.ge.s32.totalorder %s25, 2
      %s27 = scalar_select %p26, 0, %s25
      %s28 = sadd.s32 1, %s19
      %s29 = scalar_select %p26, %s28, %s19
      %p30 = scmp.ge.s32.totalorder %s29, 1
      %s31 = scalar_select %p30, 0, %s29
      %s32 = ssub.s32 %s19, %s31
      %p33 = scmp.eq.s32.totalorder %s32, 0
      %s35 = sadd.s32 %s34, 1
      %s36 = scalar_select %p33, %s34, %s35
      %p39 = pneg %p33
      %p40 = scmp.eq.s32.totalorder %s12, 1
      %p41 = por %p39, %p40
      %p42 = scmp.ne.s32.totalorder %s34, %s37
      %p43 = scmp.eq.s32.totalorder %s12, 0
      %p44 = por %p42, %p43
      %p45 = scmp.ne.s32.totalorder %s34, %s37
      %p46 = scmp.eq.s32.totalorder %s17, 1
      %p47 = por %p45, %p46
      %p48 = scmp.ne.s32.totalorder %s37, %s38
      %p49 = scmp.eq.s32.totalorder %s17, 0
      %p50 = por %p48, %p49
      %p51 = scmp.ne.s32.totalorder %s37, %s38
      %p52 = scmp.eq.s32.totalorder %s18, 1
      %p53 = por %p51, %p52
      %p55 = scmp.ne.s32.totalorder %s38, %s54
      %p56 = scmp.eq.s32.totalorder %s18, 0
      %p57 = por %p55, %p56
      %s59 = sadd.s32 %s58, 1
      %p62 = scmp.eq.s32.totalorder %s12, 1
      %p63 = scmp.ne.s32.totalorder %s58, %s60
      %p64 = scmp.eq.s32.totalorder %s12, 0
      %p65 = por %p63, %p64
      %p66 = scmp.ne.s32.totalorder %s58, %s60
      %p67 = scmp.eq.s32.totalorder %s17, 1
      %p68 = por %p66, %p67
      %p69 = scmp.ne.s32.totalorder %s60, %s61
      %p70 = scmp.eq.s32.totalorder %s17, 0
      %p71 = por %p69, %p70
      %p72 = scmp.ne.s32.totalorder %s60, %s61
      %p73 = scmp.eq.s32.totalorder %s18, 1
      %p74 = por %p72, %p73
      %p76 = scmp.ne.s32.totalorder %s61, %s75
      %p77 = scmp.eq.s32.totalorder %s18, 0
      %p78 = por %p76, %p77
      %s79 = ssub.s32 %s19, %s31
      %s80 = ssub.s32 %s20, %s27
      %s81 = sor.u32 %s79, %s80
      %p82 = scmp.eq.s32.totalorder %s81, 0
      %s84 = sadd.s32 %s83, 1
      %s85 = scalar_select %p82, %s83, %s84
      %p88 = pneg %p82
      %p89 = scmp.eq.s32.totalorder %s12, 1
      %p90 = por %p88, %p89
      %p91 = scmp.ne.s32.totalorder %s83, %s86
      %p92 = scmp.eq.s32.totalorder %s12, 0
      %p93 = por %p91, %p92
      %p94 = scmp.ne.s32.totalorder %s83, %s86
      %p95 = scmp.eq.s32.totalorder %s17, 1
      %p96 = por %p94, %p95
      %p97 = scmp.ne.s32.totalorder %s86, %s87
      %p98 = scmp.eq.s32.totalorder %s17, 0
      %p99 = por %p97, %p98
      %p100 = scmp.ne.s32.totalorder %s86, %s87
      %p101 = scmp.eq.s32.totalorder %s18, 1
      %p102 = por %p100, %p101
      %p104 = scmp.ne.s32.totalorder %s87, %s103
      %p105 = scmp.eq.s32.totalorder %s18, 0
      %p106 = por %p104, %p105
      %p107 = scmp.le.s32.totalorder 1, %s12
      %p108 = scmp.lt.s32.totalorder %s12, 3
      %p109 = pnand %p107, %p108
      %p110 = pneg %p109
      // Predicated region
      $region9: #{tpu_custom_call.1} parent=5 // pred_check
        _
      $region10: #{tpu_custom_call.1} parent=5 // pred_check_branch
        %112 = sbr.rel (%p109) target = $region12
      $region11: #{tpu_custom_call.1} parent=5 // pred_region
        %s113 = ssub.s32 %s12, 1
        // Predicated region
        $region13: #{tpu_custom_call.1} parent=11 // pred_check
          %p114 = pneg %p50
        $region14: #{tpu_custom_call.1} parent=11 // pred_check_branch
          %116 = sbr.rel (%p114) target = $region16
        $region15: #{tpu_custom_call.1} parent=11 // pred_region
          %s117 = smul.u32 2, %s21
          %p118 = scmp.lt.s32.totalorder %s117, 1
          %s119 = scalar_select %p118, %s117, 1
          %s120 = smul.addr %s119, 3
          %s121 = smul.addr %s120, 8
          %s122 = scalar_lea.vmem %s0, %s121
          %s123 = smul.u32 2, %s21
        $region16: #{tpu_custom_call.1} parent=11 // pred_fallthru
          _
        // Predicated region
        $region17: #{tpu_custom_call.1} parent=11 // pred_check
          %p124 = pneg %p71
        $region18: #{tpu_custom_call.1} parent=11 // pred_check_branch
          %126 = sbr.rel (%p124) target = $region20
        $region19: #{tpu_custom_call.1} parent=11 // pred_region
          %s128 = ssub.s32 64, 64
          %129 = vsyncadd [#allocation4], %s128
          %s131 = sshll.u32 %s1, 4
          %s132 = int_to_ptr.vmem [resolvable:$true] %s131
          %134 = dma.vmem_to_smem %s132, 64, [#allocation2], [#allocation4]
        $region20: #{tpu_custom_call.1} parent=11 // pred_fallthru
          _
      $region12: #{tpu_custom_call.1} parent=5 // pred_fallthru
        _
      %p135 = scmp.lt.s32.totalorder %s12, 2
      // Predicated region
      $region21: #{tpu_custom_call.1} parent=5 // pred_check
        %p136 = pneg %p135
      $region22: #{tpu_custom_call.1} parent=5 // pred_check_branch
        %138 = sbr.rel (%p136) target = $region24
      $region23: #{tpu_custom_call.1} parent=5 // pred_region
        _
      $region24: #{tpu_custom_call.1} parent=5 // pred_fallthru
        _
      %p139 = scmp.le.s32.totalorder 1, %s12
      %p140 = scmp.lt.s32.totalorder %s12, 3
      %p141 = pnand %p139, %p140
      %p142 = pneg %p141
      // Predicated region
      $region25: #{tpu_custom_call.1} parent=5 // pred_check
        _
      $region26: #{tpu_custom_call.1} parent=5 // pred_check_branch
        %144 = sbr.rel (%p141) target = $region28
      $region27: #{tpu_custom_call.1} parent=5 // pred_region
        %s145 = ssub.s32 %s12, 1
        // Predicated region
        $region29: #{tpu_custom_call.1} parent=27 // pred_check
          %p146 = pneg %p71
        $region30: #{tpu_custom_call.1} parent=27 // pred_check_branch
          %148 = sbr.rel (%p146) target = $region32
        $region31: #{tpu_custom_call.1} parent=27 // pred_region
          %149 = dma.done [#allocation4], 64
        $region32: #{tpu_custom_call.1} parent=27 // pred_fallthru
          _
        %150 = sfence
        %s151 = smul.u32 2, %s21
        %p152 = scmp.lt.s32.totalorder %s151, 1
        %s153 = scalar_select %p152, %s151, 1
        %s154 = smul.addr %s153, 3
        %s155 = smul.addr %s154, 8
        %s156 = scalar_lea.vmem %s0, %s155
        %p157 = pneg %p50
        %p158 = pneg %p47
        %p159 = pneg %p71
        %p160 = pneg %p68
        %p161 = pneg %p99
        %p162 = pneg %p96
        %s163 = sand.u32 %s86, 1
        %s164 = scalar_lea.sflag [#allocation3], %s163
        %s165 = sand.u32 %s86, 1
        %s166 = smul.addr %s165, 64
        %s167 = scalar_lea.vmem [#allocation5], %s166
        %s168 = smul.u32 2, %s21
        %p169 = scmp.lt.s32.totalorder %s168, 1
        %s170 = scalar_select %p169, %s168, 1
        %s171 = smul.addr %s170, 3
        %s172 = smul.addr %s171, 8
        %s173 = scalar_lea.vmem %s0, %s172
        %s174 = smul.u32 2, %s21
        %s175 = smul.u32 2, %s21
        %s176 = smul.u32 %s22, 8
        %s177 = scalar_lea.vmem %s173, %s176
        %v178 = vld [vmem:[%s177] sm:$0xff]
        %v179 = vld [vmem:[%s177 + $0x8] sm:$0xf]
        %v180 = vld [vmem:[%s177 + $0x18] sm:$0xff]
        %v181 = vld [vmem:[%s177 + $0x20] sm:$0xf]
        %s182 = sld [smem:[#allocation2]]
        %v183 = vstv %s182
        %v184 = vmul.f32 %v183, %v178
        %v185 = vmul.f32 %v183, %v180
        %v186 = vadd.f32 %v184, 0.0
        %v187 = vadd.f32 %v185, 0.0
        %s188 = sld [smem:[#allocation2 + $0x80]]
        %v189 = vstv %s188
        %v190 = vmul.f32 %v189, %v178
        %v191 = vmul.f32 %v189, %v180
        %v192 = vadd.f32 %v190, 0.0
        %v193 = vadd.f32 %v191, 0.0
        %s194 = sld [smem:[#allocation2 + $0x100]]
        %v195 = vstv %s194
        %v196 = vmul.f32 %v195, %v178
        %v197 = vmul.f32 %v195, %v180
        %v198 = vadd.f32 %v196, 0.0
        %v199 = vadd.f32 %v197, 0.0
        %s200 = sld [smem:[#allocation2 + $0x180]]
        %v201 = vstv %s200
        %v202 = vmul.f32 %v201, %v178
        %v203 = vmul.f32 %v201, %v180
        %v204 = vadd.f32 %v202, 0.0
        %v205 = vadd.f32 %v203, 0.0
        %s206 = sld [smem:[#allocation2 + $0x1]]
        %v207 = vstv %s206
        %v208 = vmul.f32 %v207, %v178
        %v209 = vmul.f32 %v207, %v180
        %212 = vrot.lane.b32.xlu0 %v208, 127
        %v213 = vpop.permute.xlu0 %212
        %214 = vrot.lane.b32.xlu0 %v209, 127
        %v215 = vpop.permute.xlu0 %214
        %v218 = vadd.f32 %v186, %v213
        %v219 = vadd.f32 %v187, %v215
        %s220 = sld [smem:[#allocation2 + $0x81]]
        %v221 = vstv %s220
        %v222 = vmul.f32 %v221, %v178
        %v223 = vmul.f32 %v221, %v180
        %226 = vrot.lane.b32.xlu0 %v222, 127
        %v227 = vpop.permute.xlu0 %226
        %228 = vrot.lane.b32.xlu0 %v223, 127
        %v229 = vpop.permute.xlu0 %228
        %v232 = vadd.f32 %v192, %v227
        %v233 = vadd.f32 %v193, %v229
        %s234 = sld [smem:[#allocation2 + $0x101]]
        %v235 = vstv %s234
        %v236 = vmul.f32 %v235, %v178
        %v237 = vmul.f32 %v235, %v180
        %240 = vrot.lane.b32.xlu0 %v236, 127
        %v241 = vpop.permute.xlu0 %240
        %242 = vrot.lane.b32.xlu0 %v237, 127
        %v243 = vpop.permute.xlu0 %242
        %v246 = vadd.f32 %v198, %v241
        %v247 = vadd.f32 %v199, %v243
        %s248 = sld [smem:[#allocation2 + $0x181]]
        %v249 = vstv %s248
        %v250 = vmul.f32 %v249, %v178
        %v251 = vmul.f32 %v249, %v180
        %254 = vrot.lane.b32.xlu0 %v250, 127
        %v255 = vpop.permute.xlu0 %254
        %256 = vrot.lane.b32.xlu0 %v251, 127
        %v257 = vpop.permute.xlu0 %256
        %v260 = vadd.f32 %v204, %v255
        %v261 = vadd.f32 %v205, %v257
        %s262 = sld [smem:[#allocation2 + $0x2]]
        %v263 = vstv %s262
        %v264 = vmul.f32 %v263, %v178
        %v265 = vmul.f32 %v263, %v180
        %268 = vrot.lane.b32.xlu0 %v264, 126
        %v269 = vpop.permute.xlu0 %268
        %270 = vrot.lane.b32.xlu0 %v265, 126
        %v271 = vpop.permute.xlu0 %270
        %v274 = vadd.f32 %v218, %v269
        %v275 = vadd.f32 %v219, %v271
        %s276 = sld [smem:[#allocation2 + $0x82]]
        %v277 = vstv %s276
        %v278 = vmul.f32 %v277, %v178
        %v279 = vmul.f32 %v277, %v180
        %282 = vrot.lane.b32.xlu0 %v278, 126
        %v283 = vpop.permute.xlu0 %282
        %284 = vrot.lane.b32.xlu0 %v279, 126
        %v285 = vpop.permute.xlu0 %284
        %v288 = vadd.f32 %v232, %v283
        %v289 = vadd.f32 %v233, %v285
        %s290 = sld [smem:[#allocation2 + $0x102]]
        %v291 = vstv %s290
        %v292 = vmul.f32 %v291, %v178
        %v293 = vmul.f32 %v291, %v180
        %296 = vrot.lane.b32.xlu0 %v292, 126
        %v297 = vpop.permute.xlu0 %296
        %298 = vrot.lane.b32.xlu0 %v293, 126
        %v299 = vpop.permute.xlu0 %298
        %v302 = vadd.f32 %v246, %v297
        %v303 = vadd.f32 %v247, %v299
        %s304 = sld [smem:[#allocation2 + $0x182]]
        %v305 = vstv %s304
        %v306 = vmul.f32 %v305, %v178
        %v307 = vmul.f32 %v305, %v180
        %310 = vrot.lane.b32.xlu0 %v306, 126
        %v311 = vpop.permute.xlu0 %310
        %312 = vrot.lane.b32.xlu0 %v307, 126
        %v313 = vpop.permute.xlu0 %312
        %v316 = vadd.f32 %v260, %v311
        %v317 = vadd.f32 %v261, %v313
        %s318 = sld [smem:[#allocation2 + $0x3]]
        %v319 = vstv %s318
        %v320 = vmul.f32 %v319, %v178
        %v321 = vmul.f32 %v319, %v180
        %324 = vrot.lane.b32.xlu0 %v320, 125
        %v325 = vpop.permute.xlu0 %324
        %326 = vrot.lane.b32.xlu0 %v321, 125
        %v327 = vpop.permute.xlu0 %326
        %v330 = vadd.f32 %v274, %v325
        %v331 = vadd.f32 %v275, %v327
        %s332 = sld [smem:[#allocation2 + $0x83]]
        %v333 = vstv %s332
        %v334 = vmul.f32 %v333, %v178
        %v335 = vmul.f32 %v333, %v180
        %338 = vrot.lane.b32.xlu0 %v334, 125
        %v339 = vpop.permute.xlu0 %338
        %340 = vrot.lane.b32.xlu0 %v335, 125
        %v341 = vpop.permute.xlu0 %340
        %v344 = vadd.f32 %v288, %v339
        %v345 = vadd.f32 %v289, %v341
        %s346 = sld [smem:[#allocation2 + $0x103]]
        %v347 = vstv %s346
        %v348 = vmul.f32 %v347, %v178
        %v349 = vmul.f32 %v347, %v180
        %352 = vrot.lane.b32.xlu0 %v348, 125
        %v353 = vpop.permute.xlu0 %352
        %354 = vrot.lane.b32.xlu0 %v349, 125
        %v355 = vpop.permute.xlu0 %354
        %v358 = vadd.f32 %v302, %v353
        %v359 = vadd.f32 %v303, %v355
        %s360 = sld [smem:[#allocation2 + $0x183]]
        %v361 = vstv %s360
        %v362 = vmul.f32 %v361, %v178
        %v363 = vmul.f32 %v361, %v180
        %366 = vrot.lane.b32.xlu0 %v362, 125
        %v367 = vpop.permute.xlu0 %366
        %368 = vrot.lane.b32.xlu0 %v363, 125
        %v369 = vpop.permute.xlu0 %368
        %v372 = vadd.f32 %v316, %v367
        %v373 = vadd.f32 %v317, %v369
        %s374 = sld [smem:[#allocation2 + $0x4]]
        %v375 = vstv %s374
        %v376 = vmul.f32 %v375, %v178
        %v377 = vmul.f32 %v375, %v180
        %380 = vrot.lane.b32.xlu0 %v376, 124
        %v381 = vpop.permute.xlu0 %380
        %382 = vrot.lane.b32.xlu0 %v377, 124
        %v383 = vpop.permute.xlu0 %382
        %v386 = vadd.f32 %v330, %v381
        %v387 = vadd.f32 %v331, %v383
        %s388 = sld [smem:[#allocation2 + $0x84]]
        %v389 = vstv %s388
        %v390 = vmul.f32 %v389, %v178
        %v391 = vmul.f32 %v389, %v180
        %394 = vrot.lane.b32.xlu0 %v390, 124
        %v395 = vpop.permute.xlu0 %394
        %396 = vrot.lane.b32.xlu0 %v391, 124
        %v397 = vpop.permute.xlu0 %396
        %v400 = vadd.f32 %v344, %v395
        %v401 = vadd.f32 %v345, %v397
        %s402 = sld [smem:[#allocation2 + $0x104]]
        %v403 = vstv %s402
        %v404 = vmul.f32 %v403, %v178
        %v405 = vmul.f32 %v403, %v180
        %408 = vrot.lane.b32.xlu0 %v404, 124
        %v409 = vpop.permute.xlu0 %408
        %410 = vrot.lane.b32.xlu0 %v405, 124
        %v411 = vpop.permute.xlu0 %410
        %v414 = vadd.f32 %v358, %v409
        %v415 = vadd.f32 %v359, %v411
        %s416 = sld [smem:[#allocation2 + $0x184]]
        %v417 = vstv %s416
        %v418 = vmul.f32 %v417, %v178
        %v419 = vmul.f32 %v417, %v180
        %422 = vrot.lane.b32.xlu0 %v418, 124
        %v423 = vpop.permute.xlu0 %422
        %424 = vrot.lane.b32.xlu0 %v419, 124
        %v425 = vpop.permute.xlu0 %424
        %v428 = vadd.f32 %v372, %v423
        %v429 = vadd.f32 %v373, %v425
        %s430 = sld [smem:[#allocation2 + $0x5]]
        %v431 = vstv %s430
        %v432 = vmul.f32 %v431, %v178
        %v433 = vmul.f32 %v431, %v179
        %v434 = vmul.f32 %v431, %v180
        %v435 = vmul.f32 %v431, %v181
        %vm440 = vcmask 1046528
        %v441 = vrot.slane %v432, 1
        %v442 = vrot.slane %v433, 1
        %v443 = vsel %vm440, %v441, %v442
        %v444 = vrot.slane %v434, 1
        %v445 = vrot.slane %v435, 1
        %v446 = vsel %vm440, %v444, %v445
        %v449 = vadd.f32 %v386, %v443
        %v450 = vadd.f32 %v387, %v446
        %s451 = sld [smem:[#allocation2 + $0x85]]
        %v452 = vstv %s451
        %v453 = vmul.f32 %v452, %v178
        %v454 = vmul.f32 %v452, %v179
        %v455 = vmul.f32 %v452, %v180
        %v456 = vmul.f32 %v452, %v181
        %v461 = vrot.slane %v453, 1
        %v462 = vrot.slane %v454, 1
        %v463 = vsel %vm440, %v461, %v462
        %v464 = vrot.slane %v455, 1
        %v465 = vrot.slane %v456, 1
        %v466 = vsel %vm440, %v464, %v465
        %v469 = vadd.f32 %v400, %v463
        %v470 = vadd.f32 %v401, %v466
        %s471 = sld [smem:[#allocation2 + $0x105]]
        %v472 = vstv %s471
        %v473 = vmul.f32 %v472, %v178
        %v474 = vmul.f32 %v472, %v179
        %v475 = vmul.f32 %v472, %v180
        %v476 = vmul.f32 %v472, %v181
        %v481 = vrot.slane %v473, 1
        %v482 = vrot.slane %v474, 1
        %v483 = vsel %vm440, %v481, %v482
        %v484 = vrot.slane %v475, 1
        %v485 = vrot.slane %v476, 1
        %v486 = vsel %vm440, %v484, %v485
        %v489 = vadd.f32 %v414, %v483
        %v490 = vadd.f32 %v415, %v486
        %s491 = sld [smem:[#allocation2 + $0x185]]
        %v492 = vstv %s491
        %v493 = vmul.f32 %v492, %v178
        %v494 = vmul.f32 %v492, %v179
        %v495 = vmul.f32 %v492, %v180
        %v496 = vmul.f32 %v492, %v181
        %v501 = vrot.slane %v493, 1
        %v502 = vrot.slane %v494, 1
        %v503 = vsel %vm440, %v501, %v502
        %v504 = vrot.slane %v495, 1
        %v505 = vrot.slane %v496, 1
        %v506 = vsel %vm440, %v504, %v505
        %v509 = vadd.f32 %v428, %v503
        %v510 = vadd.f32 %v429, %v506
        %s511 = sld [smem:[#allocation2 + $0x6]]
        %v512 = vstv %s511
        %v513 = vmul.f32 %v512, %v178
        %v514 = vmul.f32 %v512, %v179
        %v515 = vmul.f32 %v512, %v180
        %v516 = vmul.f32 %v512, %v181
        %v521 = vrot.slane %v513, 1
        %v522 = vrot.slane %v514, 1
        %v523 = vsel %vm440, %v521, %v522
        %v524 = vrot.slane %v515, 1
        %v525 = vrot.slane %v516, 1
        %v526 = vsel %vm440, %v524, %v525
        %527 = vrot.lane.b32.xlu0 %v523, 127
        %v528 = vpop.permute.xlu0 %527
        %529 = vrot.lane.b32.xlu0 %v526, 127
        %v530 = vpop.permute.xlu0 %529
        %v533 = vadd.f32 %v449, %v528
        %v534 = vadd.f32 %v450, %v530
        %s535 = sld [smem:[#allocation2 + $0x86]]
        %v536 = vstv %s535
        %v537 = vmul.f32 %v536, %v178
        %v538 = vmul.f32 %v536, %v179
        %v539 = vmul.f32 %v536, %v180
        %v540 = vmul.f32 %v536, %v181
        %v545 = vrot.slane %v537, 1
        %v546 = vrot.slane %v538, 1
        %v547 = vsel %vm440, %v545, %v546
        %v548 = vrot.slane %v539, 1
        %v549 = vrot.slane %v540, 1
        %v550 = vsel %vm440, %v548, %v549
        %551 = vrot.lane.b32.xlu0 %v547, 127
        %v552 = vpop.permute.xlu0 %551
        %553 = vrot.lane.b32.xlu0 %v550, 127
        %v554 = vpop.permute.xlu0 %553
        %v557 = vadd.f32 %v469, %v552
        %v558 = vadd.f32 %v470, %v554
        %s559 = sld [smem:[#allocation2 + $0x106]]
        %v560 = vstv %s559
        %v561 = vmul.f32 %v560, %v178
        %v562 = vmul.f32 %v560, %v179
        %v563 = vmul.f32 %v560, %v180
        %v564 = vmul.f32 %v560, %v181
        %v569 = vrot.slane %v561, 1
        %v570 = vrot.slane %v562, 1
        %v571 = vsel %vm440, %v569, %v570
        %v572 = vrot.slane %v563, 1
        %v573 = vrot.slane %v564, 1
        %v574 = vsel %vm440, %v572, %v573
        %575 = vrot.lane.b32.xlu0 %v571, 127
        %v576 = vpop.permute.xlu0 %575
        %577 = vrot.lane.b32.xlu0 %v574, 127
        %v578 = vpop.permute.xlu0 %577
        %v581 = vadd.f32 %v489, %v576
        %v582 = vadd.f32 %v490, %v578
        %s583 = sld [smem:[#allocation2 + $0x186]]
        %v584 = vstv %s583
        %v585 = vmul.f32 %v584, %v178
        %v586 = vmul.f32 %v584, %v179
        %v587 = vmul.f32 %v584, %v180
        %v588 = vmul.f32 %v584, %v181
        %v593 = vrot.slane %v585, 1
        %v594 = vrot.slane %v586, 1
        %v595 = vsel %vm440, %v593, %v594
        %v596 = vrot.slane %v587, 1
        %v597 = vrot.slane %v588, 1
        %v598 = vsel %vm440, %v596, %v597
        %599 = vrot.lane.b32.xlu0 %v595, 127
        %v600 = vpop.permute.xlu0 %599
        %601 = vrot.lane.b32.xlu0 %v598, 127
        %v602 = vpop.permute.xlu0 %601
        %v605 = vadd.f32 %v509, %v600
        %v606 = vadd.f32 %v510, %v602
        %s607 = sld [smem:[#allocation2 + $0x7]]
        %v608 = vstv %s607
        %v609 = vmul.f32 %v608, %v178
        %v610 = vmul.f32 %v608, %v179
        %v611 = vmul.f32 %v608, %v180
        %v612 = vmul.f32 %v608, %v181
        %v617 = vrot.slane %v609, 1
        %v618 = vrot.slane %v610, 1
        %v619 = vsel %vm440, %v617, %v618
        %v620 = vrot.slane %v611, 1
        %v621 = vrot.slane %v612, 1
        %v622 = vsel %vm440, %v620, %v621
        %623 = vrot.lane.b32.xlu0 %v619, 126
        %v624 = vpop.permute.xlu0 %623
        %625 = vrot.lane.b32.xlu0 %v622, 126
        %v626 = vpop.permute.xlu0 %625
        %v629 = vadd.f32 %v533, %v624
        %v630 = vadd.f32 %v534, %v626
        %s631 = sld [smem:[#allocation2 + $0x87]]
        %v632 = vstv %s631
        %v633 = vmul.f32 %v632, %v178
        %v634 = vmul.f32 %v632, %v179
        %v635 = vmul.f32 %v632, %v180
        %v636 = vmul.f32 %v632, %v181
        %v641 = vrot.slane %v633, 1
        %v642 = vrot.slane %v634, 1
        %v643 = vsel %vm440, %v641, %v642
        %v644 = vrot.slane %v635, 1
        %v645 = vrot.slane %v636, 1
        %v646 = vsel %vm440, %v644, %v645
        %647 = vrot.lane.b32.xlu0 %v643, 126
        %v648 = vpop.permute.xlu0 %647
        %649 = vrot.lane.b32.xlu0 %v646, 126
        %v650 = vpop.permute.xlu0 %649
        %v653 = vadd.f32 %v557, %v648
        %v654 = vadd.f32 %v558, %v650
        %s655 = sld [smem:[#allocation2 + $0x107]]
        %v656 = vstv %s655
        %v657 = vmul.f32 %v656, %v178
        %v658 = vmul.f32 %v656, %v179
        %v659 = vmul.f32 %v656, %v180
        %v660 = vmul.f32 %v656, %v181
        %v665 = vrot.slane %v657, 1
        %v666 = vrot.slane %v658, 1
        %v667 = vsel %vm440, %v665, %v666
        %v668 = vrot.slane %v659, 1
        %v669 = vrot.slane %v660, 1
        %v670 = vsel %vm440, %v668, %v669
        %671 = vrot.lane.b32.xlu0 %v667, 126
        %v672 = vpop.permute.xlu0 %671
        %673 = vrot.lane.b32.xlu0 %v670, 126
        %v674 = vpop.permute.xlu0 %673
        %v677 = vadd.f32 %v581, %v672
        %v678 = vadd.f32 %v582, %v674
        %s679 = sld [smem:[#allocation2 + $0x187]]
        %v680 = vstv %s679
        %v681 = vmul.f32 %v680, %v178
        %v682 = vmul.f32 %v680, %v179
        %v683 = vmul.f32 %v680, %v180
        %v684 = vmul.f32 %v680, %v181
        %v689 = vrot.slane %v681, 1
        %v690 = vrot.slane %v682, 1
        %v691 = vsel %vm440, %v689, %v690
        %v692 = vrot.slane %v683, 1
        %v693 = vrot.slane %v684, 1
        %v694 = vsel %vm440, %v692, %v693
        %695 = vrot.lane.b32.xlu0 %v691, 126
        %v696 = vpop.permute.xlu0 %695
        %697 = vrot.lane.b32.xlu0 %v694, 126
        %v698 = vpop.permute.xlu0 %697
        %v701 = vadd.f32 %v605, %v696
        %v702 = vadd.f32 %v606, %v698
        %s703 = sld [smem:[#allocation2 + $0x8]]
        %v704 = vstv %s703
        %v705 = vmul.f32 %v704, %v178
        %v706 = vmul.f32 %v704, %v179
        %v707 = vmul.f32 %v704, %v180
        %v708 = vmul.f32 %v704, %v181
        %v713 = vrot.slane %v705, 1
        %v714 = vrot.slane %v706, 1
        %v715 = vsel %vm440, %v713, %v714
        %v716 = vrot.slane %v707, 1
        %v717 = vrot.slane %v708, 1
        %v718 = vsel %vm440, %v716, %v717
        %719 = vrot.lane.b32.xlu0 %v715, 125
        %v720 = vpop.permute.xlu0 %719
        %721 = vrot.lane.b32.xlu0 %v718, 125
        %v722 = vpop.permute.xlu0 %721
        %v725 = vadd.f32 %v629, %v720
        %v726 = vadd.f32 %v630, %v722
        %s727 = sld [smem:[#allocation2 + $0x88]]
        %v728 = vstv %s727
        %v729 = vmul.f32 %v728, %v178
        %v730 = vmul.f32 %v728, %v179
        %v731 = vmul.f32 %v728, %v180
        %v732 = vmul.f32 %v728, %v181
        %v737 = vrot.slane %v729, 1
        %v738 = vrot.slane %v730, 1
        %v739 = vsel %vm440, %v737, %v738
        %v740 = vrot.slane %v731, 1
        %v741 = vrot.slane %v732, 1
        %v742 = vsel %vm440, %v740, %v741
        %743 = vrot.lane.b32.xlu0 %v739, 125
        %v744 = vpop.permute.xlu0 %743
        %745 = vrot.lane.b32.xlu0 %v742, 125
        %v746 = vpop.permute.xlu0 %745
        %v749 = vadd.f32 %v653, %v744
        %v750 = vadd.f32 %v654, %v746
        %s751 = sld [smem:[#allocation2 + $0x108]]
        %v752 = vstv %s751
        %v753 = vmul.f32 %v752, %v178
        %v754 = vmul.f32 %v752, %v179
        %v755 = vmul.f32 %v752, %v180
        %v756 = vmul.f32 %v752, %v181
        %v761 = vrot.slane %v753, 1
        %v762 = vrot.slane %v754, 1
        %v763 = vsel %vm440, %v761, %v762
        %v764 = vrot.slane %v755, 1
        %v765 = vrot.slane %v756, 1
        %v766 = vsel %vm440, %v764, %v765
        %767 = vrot.lane.b32.xlu0 %v763, 125
        %v768 = vpop.permute.xlu0 %767
        %769 = vrot.lane.b32.xlu0 %v766, 125
        %v770 = vpop.permute.xlu0 %769
        %v773 = vadd.f32 %v677, %v768
        %v774 = vadd.f32 %v678, %v770
        %s775 = sld [smem:[#allocation2 + $0x188]]
        %v776 = vstv %s775
        %v777 = vmul.f32 %v776, %v178
        %v778 = vmul.f32 %v776, %v179
        %v779 = vmul.f32 %v776, %v180
        %v780 = vmul.f32 %v776, %v181
        %v785 = vrot.slane %v777, 1
        %v786 = vrot.slane %v778, 1
        %v787 = vsel %vm440, %v785, %v786
        %v788 = vrot.slane %v779, 1
        %v789 = vrot.slane %v780, 1
        %v790 = vsel %vm440, %v788, %v789
        %791 = vrot.lane.b32.xlu0 %v787, 125
        %v792 = vpop.permute.xlu0 %791
        %793 = vrot.lane.b32.xlu0 %v790, 125
        %v794 = vpop.permute.xlu0 %793
        %v797 = vadd.f32 %v701, %v792
        %v798 = vadd.f32 %v702, %v794
        %s799 = sld [smem:[#allocation2 + $0x9]]
        %v800 = vstv %s799
        %v801 = vmul.f32 %v800, %v178
        %v802 = vmul.f32 %v800, %v179
        %v803 = vmul.f32 %v800, %v180
        %v804 = vmul.f32 %v800, %v181
        %v809 = vrot.slane %v801, 1
        %v810 = vrot.slane %v802, 1
        %v811 = vsel %vm440, %v809, %v810
        %v812 = vrot.slane %v803, 1
        %v813 = vrot.slane %v804, 1
        %v814 = vsel %vm440, %v812, %v813
        %815 = vrot.lane.b32.xlu0 %v811, 124
        %v816 = vpop.permute.xlu0 %815
        %817 = vrot.lane.b32.xlu0 %v814, 124
        %v818 = vpop.permute.xlu0 %817
        %v821 = vadd.f32 %v725, %v816
        %v822 = vadd.f32 %v726, %v818
        %s823 = sld [smem:[#allocation2 + $0x89]]
        %v824 = vstv %s823
        %v825 = vmul.f32 %v824, %v178
        %v826 = vmul.f32 %v824, %v179
        %v827 = vmul.f32 %v824, %v180
        %v828 = vmul.f32 %v824, %v181
        %v833 = vrot.slane %v825, 1
        %v834 = vrot.slane %v826, 1
        %v835 = vsel %vm440, %v833, %v834
        %v836 = vrot.slane %v827, 1
        %v837 = vrot.slane %v828, 1
        %v838 = vsel %vm440, %v836, %v837
        %839 = vrot.lane.b32.xlu0 %v835, 124
        %v840 = vpop.permute.xlu0 %839
        %841 = vrot.lane.b32.xlu0 %v838, 124
        %v842 = vpop.permute.xlu0 %841
        %v845 = vadd.f32 %v749, %v840
        %v846 = vadd.f32 %v750, %v842
        %s847 = sld [smem:[#allocation2 + $0x109]]
        %v848 = vstv %s847
        %v849 = vmul.f32 %v848, %v178
        %v850 = vmul.f32 %v848, %v179
        %v851 = vmul.f32 %v848, %v180
        %v852 = vmul.f32 %v848, %v181
        %v857 = vrot.slane %v849, 1
        %v858 = vrot.slane %v850, 1
        %v859 = vsel %vm440, %v857, %v858
        %v860 = vrot.slane %v851, 1
        %v861 = vrot.slane %v852, 1
        %v862 = vsel %vm440, %v860, %v861
        %863 = vrot.lane.b32.xlu0 %v859, 124
        %v864 = vpop.permute.xlu0 %863
        %865 = vrot.lane.b32.xlu0 %v862, 124
        %v866 = vpop.permute.xlu0 %865
        %v869 = vadd.f32 %v773, %v864
        %v870 = vadd.f32 %v774, %v866
        %s871 = sld [smem:[#allocation2 + $0x189]]
        %v872 = vstv %s871
        %v873 = vmul.f32 %v872, %v178
        %v874 = vmul.f32 %v872, %v179
        %v875 = vmul.f32 %v872, %v180
        %v876 = vmul.f32 %v872, %v181
        %v881 = vrot.slane %v873, 1
        %v882 = vrot.slane %v874, 1
        %v883 = vsel %vm440, %v881, %v882
        %v884 = vrot.slane %v875, 1
        %v885 = vrot.slane %v876, 1
        %v886 = vsel %vm440, %v884, %v885
        %887 = vrot.lane.b32.xlu0 %v883, 124
        %v888 = vpop.permute.xlu0 %887
        %889 = vrot.lane.b32.xlu0 %v886, 124
        %v890 = vpop.permute.xlu0 %889
        %v893 = vadd.f32 %v797, %v888
        %v894 = vadd.f32 %v798, %v890
        %s895 = sld [smem:[#allocation2 + $0xa]]
        %v896 = vstv %s895
        %v897 = vmul.f32 %v896, %v178
        %v898 = vmul.f32 %v896, %v179
        %v899 = vmul.f32 %v896, %v180
        %v900 = vmul.f32 %v896, %v181
        %vm905 = vcmask 1045504
        %v906 = vrot.slane %v897, 2
        %v907 = vrot.slane %v898, 2
        %v908 = vsel %vm905, %v906, %v907
        %v909 = vrot.slane %v899, 2
        %v910 = vrot.slane %v900, 2
        %v911 = vsel %vm905, %v909, %v910
        %v914 = vadd.f32 %v821, %v908
        %v915 = vadd.f32 %v822, %v911
        %s916 = sld [smem:[#allocation2 + $0x8a]]
        %v917 = vstv %s916
        %v918 = vmul.f32 %v917, %v178
        %v919 = vmul.f32 %v917, %v179
        %v920 = vmul.f32 %v917, %v180
        %v921 = vmul.f32 %v917, %v181
        %v926 = vrot.slane %v918, 2
        %v927 = vrot.slane %v919, 2
        %v928 = vsel %vm905, %v926, %v927
        %v929 = vrot.slane %v920, 2
        %v930 = vrot.slane %v921, 2
        %v931 = vsel %vm905, %v929, %v930
        %v934 = vadd.f32 %v845, %v928
        %v935 = vadd.f32 %v846, %v931
        %s936 = sld [smem:[#allocation2 + $0x10a]]
        %v937 = vstv %s936
        %v938 = vmul.f32 %v937, %v178
        %v939 = vmul.f32 %v937, %v179
        %v940 = vmul.f32 %v937, %v180
        %v941 = vmul.f32 %v937, %v181
        %v946 = vrot.slane %v938, 2
        %v947 = vrot.slane %v939, 2
        %v948 = vsel %vm905, %v946, %v947
        %v949 = vrot.slane %v940, 2
        %v950 = vrot.slane %v941, 2
        %v951 = vsel %vm905, %v949, %v950
        %v954 = vadd.f32 %v869, %v948
        %v955 = vadd.f32 %v870, %v951
        %s956 = sld [smem:[#allocation2 + $0x18a]]
        %v957 = vstv %s956
        %v958 = vmul.f32 %v957, %v178
        %v959 = vmul.f32 %v957, %v179
        %v960 = vmul.f32 %v957, %v180
        %v961 = vmul.f32 %v957, %v181
        %v966 = vrot.slane %v958, 2
        %v967 = vrot.slane %v959, 2
        %v968 = vsel %vm905, %v966, %v967
        %v969 = vrot.slane %v960, 2
        %v970 = vrot.slane %v961, 2
        %v971 = vsel %vm905, %v969, %v970
        %v974 = vadd.f32 %v893, %v968
        %v975 = vadd.f32 %v894, %v971
        %s976 = sld [smem:[#allocation2 + $0xb]]
        %v977 = vstv %s976
        %v978 = vmul.f32 %v977, %v178
        %v979 = vmul.f32 %v977, %v179
        %v980 = vmul.f32 %v977, %v180
        %v981 = vmul.f32 %v977, %v181
        %v986 = vrot.slane %v978, 2
        %v987 = vrot.slane %v979, 2
        %v988 = vsel %vm905, %v986, %v987
        %v989 = vrot.slane %v980, 2
        %v990 = vrot.slane %v981, 2
        %v991 = vsel %vm905, %v989, %v990
        %992 = vrot.lane.b32.xlu0 %v988, 127
        %v993 = vpop.permute.xlu0 %992
        %994 = vrot.lane.b32.xlu0 %v991, 127
        %v995 = vpop.permute.xlu0 %994
        %v998 = vadd.f32 %v914, %v993
        %v999 = vadd.f32 %v915, %v995
        %s1000 = sld [smem:[#allocation2 + $0x8b]]
        %v1001 = vstv %s1000
        %v1002 = vmul.f32 %v1001, %v178
        %v1003 = vmul.f32 %v1001, %v179
        %v1004 = vmul.f32 %v1001, %v180
        %v1005 = vmul.f32 %v1001, %v181
        %v1010 = vrot.slane %v1002, 2
        %v1011 = vrot.slane %v1003, 2
        %v1012 = vsel %vm905, %v1010, %v1011
        %v1013 = vrot.slane %v1004, 2
        %v1014 = vrot.slane %v1005, 2
        %v1015 = vsel %vm905, %v1013, %v1014
        %1016 = vrot.lane.b32.xlu0 %v1012, 127
        %v1017 = vpop.permute.xlu0 %1016
        %1018 = vrot.lane.b32.xlu0 %v1015, 127
        %v1019 = vpop.permute.xlu0 %1018
        %v1022 = vadd.f32 %v934, %v1017
        %v1023 = vadd.f32 %v935, %v1019
        %s1024 = sld [smem:[#allocation2 + $0x10b]]
        %v1025 = vstv %s1024
        %v1026 = vmul.f32 %v1025, %v178
        %v1027 = vmul.f32 %v1025, %v179
        %v1028 = vmul.f32 %v1025, %v180
        %v1029 = vmul.f32 %v1025, %v181
        %v1034 = vrot.slane %v1026, 2
        %v1035 = vrot.slane %v1027, 2
        %v1036 = vsel %vm905, %v1034, %v1035
        %v1037 = vrot.slane %v1028, 2
        %v1038 = vrot.slane %v1029, 2
        %v1039 = vsel %vm905, %v1037, %v1038
        %1040 = vrot.lane.b32.xlu0 %v1036, 127
        %v1041 = vpop.permute.xlu0 %1040
        %1042 = vrot.lane.b32.xlu0 %v1039, 127
        %v1043 = vpop.permute.xlu0 %1042
        %v1046 = vadd.f32 %v954, %v1041
        %v1047 = vadd.f32 %v955, %v1043
        %s1048 = sld [smem:[#allocation2 + $0x18b]]
        %v1049 = vstv %s1048
        %v1050 = vmul.f32 %v1049, %v178
        %v1051 = vmul.f32 %v1049, %v179
        %v1052 = vmul.f32 %v1049, %v180
        %v1053 = vmul.f32 %v1049, %v181
        %v1058 = vrot.slane %v1050, 2
        %v1059 = vrot.slane %v1051, 2
        %v1060 = vsel %vm905, %v1058, %v1059
        %v1061 = vrot.slane %v1052, 2
        %v1062 = vrot.slane %v1053, 2
        %v1063 = vsel %vm905, %v1061, %v1062
        %1064 = vrot.lane.b32.xlu0 %v1060, 127
        %v1065 = vpop.permute.xlu0 %1064
        %1066 = vrot.lane.b32.xlu0 %v1063, 127
        %v1067 = vpop.permute.xlu0 %1066
        %v1070 = vadd.f32 %v974, %v1065
        %v1071 = vadd.f32 %v975, %v1067
        %s1072 = sld [smem:[#allocation2 + $0xc]]
        %v1073 = vstv %s1072
        %v1074 = vmul.f32 %v1073, %v178
        %v1075 = vmul.f32 %v1073, %v179
        %v1076 = vmul.f32 %v1073, %v180
        %v1077 = vmul.f32 %v1073, %v181
        %v1082 = vrot.slane %v1074, 2
        %v1083 = vrot.slane %v1075, 2
        %v1084 = vsel %vm905, %v1082, %v1083
        %v1085 = vrot.slane %v1076, 2
        %v1086 = vrot.slane %v1077, 2
        %v1087 = vsel %vm905, %v1085, %v1086
        %1088 = vrot.lane.b32.xlu0 %v1084, 126
        %v1089 = vpop.permute.xlu0 %1088
        %1090 = vrot.lane.b32.xlu0 %v1087, 126
        %v1091 = vpop.permute.xlu0 %1090
        %v1094 = vadd.f32 %v998, %v1089
        %v1095 = vadd.f32 %v999, %v1091
        %s1096 = sld [smem:[#allocation2 + $0x8c]]
        %v1097 = vstv %s1096
        %v1098 = vmul.f32 %v1097, %v178
        %v1099 = vmul.f32 %v1097, %v179
        %v1100 = vmul.f32 %v1097, %v180
        %v1101 = vmul.f32 %v1097, %v181
        %v1106 = vrot.slane %v1098, 2
        %v1107 = vrot.slane %v1099, 2
        %v1108 = vsel %vm905, %v1106, %v1107
        %v1109 = vrot.slane %v1100, 2
        %v1110 = vrot.slane %v1101, 2
        %v1111 = vsel %vm905, %v1109, %v1110
        %1112 = vrot.lane.b32.xlu0 %v1108, 126
        %v1113 = vpop.permute.xlu0 %1112
        %1114 = vrot.lane.b32.xlu0 %v1111, 126
        %v1115 = vpop.permute.xlu0 %1114
        %v1118 = vadd.f32 %v1022, %v1113
        %v1119 = vadd.f32 %v1023, %v1115
        %s1120 = sld [smem:[#allocation2 + $0x10c]]
        %v1121 = vstv %s1120
        %v1122 = vmul.f32 %v1121, %v178
        %v1123 = vmul.f32 %v1121, %v179
        %v1124 = vmul.f32 %v1121, %v180
        %v1125 = vmul.f32 %v1121, %v181
        %v1130 = vrot.slane %v1122, 2
        %v1131 = vrot.slane %v1123, 2
        %v1132 = vsel %vm905, %v1130, %v1131
        %v1133 = vrot.slane %v1124, 2
        %v1134 = vrot.slane %v1125, 2
        %v1135 = vsel %vm905, %v1133, %v1134
        %1136 = vrot.lane.b32.xlu0 %v1132, 126
        %v1137 = vpop.permute.xlu0 %1136
        %1138 = vrot.lane.b32.xlu0 %v1135, 126
        %v1139 = vpop.permute.xlu0 %1138
        %v1142 = vadd.f32 %v1046, %v1137
        %v1143 = vadd.f32 %v1047, %v1139
        %s1144 = sld [smem:[#allocation2 + $0x18c]]
        %v1145 = vstv %s1144
        %v1146 = vmul.f32 %v1145, %v178
        %v1147 = vmul.f32 %v1145, %v179
        %v1148 = vmul.f32 %v1145, %v180
        %v1149 = vmul.f32 %v1145, %v181
        %v1154 = vrot.slane %v1146, 2
        %v1155 = vrot.slane %v1147, 2
        %v1156 = vsel %vm905, %v1154, %v1155
        %v1157 = vrot.slane %v1148, 2
        %v1158 = vrot.slane %v1149, 2
        %v1159 = vsel %vm905, %v1157, %v1158
        %1160 = vrot.lane.b32.xlu0 %v1156, 126
        %v1161 = vpop.permute.xlu0 %1160
        %1162 = vrot.lane.b32.xlu0 %v1159, 126
        %v1163 = vpop.permute.xlu0 %1162
        %v1166 = vadd.f32 %v1070, %v1161
        %v1167 = vadd.f32 %v1071, %v1163
        %s1168 = sld [smem:[#allocation2 + $0xd]]
        %v1169 = vstv %s1168
        %v1170 = vmul.f32 %v1169, %v178
        %v1171 = vmul.f32 %v1169, %v179
        %v1172 = vmul.f32 %v1169, %v180
        %v1173 = vmul.f32 %v1169, %v181
        %v1178 = vrot.slane %v1170, 2
        %v1179 = vrot.slane %v1171, 2
        %v1180 = vsel %vm905, %v1178, %v1179
        %v1181 = vrot.slane %v1172, 2
        %v1182 = vrot.slane %v1173, 2
        %v1183 = vsel %vm905, %v1181, %v1182
        %1184 = vrot.lane.b32.xlu0 %v1180, 125
        %v1185 = vpop.permute.xlu0 %1184
        %1186 = vrot.lane.b32.xlu0 %v1183, 125
        %v1187 = vpop.permute.xlu0 %1186
        %v1190 = vadd.f32 %v1094, %v1185
        %v1191 = vadd.f32 %v1095, %v1187
        %s1192 = sld [smem:[#allocation2 + $0x8d]]
        %v1193 = vstv %s1192
        %v1194 = vmul.f32 %v1193, %v178
        %v1195 = vmul.f32 %v1193, %v179
        %v1196 = vmul.f32 %v1193, %v180
        %v1197 = vmul.f32 %v1193, %v181
        %v1202 = vrot.slane %v1194, 2
        %v1203 = vrot.slane %v1195, 2
        %v1204 = vsel %vm905, %v1202, %v1203
        %v1205 = vrot.slane %v1196, 2
        %v1206 = vrot.slane %v1197, 2
        %v1207 = vsel %vm905, %v1205, %v1206
        %1208 = vrot.lane.b32.xlu0 %v1204, 125
        %v1209 = vpop.permute.xlu0 %1208
        %1210 = vrot.lane.b32.xlu0 %v1207, 125
        %v1211 = vpop.permute.xlu0 %1210
        %v1214 = vadd.f32 %v1118, %v1209
        %v1215 = vadd.f32 %v1119, %v1211
        %s1216 = sld [smem:[#allocation2 + $0x10d]]
        %v1217 = vstv %s1216
        %v1218 = vmul.f32 %v1217, %v178
        %v1219 = vmul.f32 %v1217, %v179
        %v1220 = vmul.f32 %v1217, %v180
        %v1221 = vmul.f32 %v1217, %v181
        %v1226 = vrot.slane %v1218, 2
        %v1227 = vrot.slane %v1219, 2
        %v1228 = vsel %vm905, %v1226, %v1227
        %v1229 = vrot.slane %v1220, 2
        %v1230 = vrot.slane %v1221, 2
        %v1231 = vsel %vm905, %v1229, %v1230
        %1232 = vrot.lane.b32.xlu0 %v1228, 125
        %v1233 = vpop.permute.xlu0 %1232
        %1234 = vrot.lane.b32.xlu0 %v1231, 125
        %v1235 = vpop.permute.xlu0 %1234
        %v1238 = vadd.f32 %v1142, %v1233
        %v1239 = vadd.f32 %v1143, %v1235
        %s1240 = sld [smem:[#allocation2 + $0x18d]]
        %v1241 = vstv %s1240
        %v1242 = vmul.f32 %v1241, %v178
        %v1243 = vmul.f32 %v1241, %v179
        %v1244 = vmul.f32 %v1241, %v180
        %v1245 = vmul.f32 %v1241, %v181
        %v1250 = vrot.slane %v1242, 2
        %v1251 = vrot.slane %v1243, 2
        %v1252 = vsel %vm905, %v1250, %v1251
        %v1253 = vrot.slane %v1244, 2
        %v1254 = vrot.slane %v1245, 2
        %v1255 = vsel %vm905, %v1253, %v1254
        %1256 = vrot.lane.b32.xlu0 %v1252, 125
        %v1257 = vpop.permute.xlu0 %1256
        %1258 = vrot.lane.b32.xlu0 %v1255, 125
        %v1259 = vpop.permute.xlu0 %1258
        %v1262 = vadd.f32 %v1166, %v1257
        %v1263 = vadd.f32 %v1167, %v1259
        %s1264 = sld [smem:[#allocation2 + $0xe]]
        %v1265 = vstv %s1264
        %v1266 = vmul.f32 %v1265, %v178
        %v1267 = vmul.f32 %v1265, %v179
        %v1268 = vmul.f32 %v1265, %v180
        %v1269 = vmul.f32 %v1265, %v181
        %v1274 = vrot.slane %v1266, 2
        %v1275 = vrot.slane %v1267, 2
        %v1276 = vsel %vm905, %v1274, %v1275
        %v1277 = vrot.slane %v1268, 2
        %v1278 = vrot.slane %v1269, 2
        %v1279 = vsel %vm905, %v1277, %v1278
        %1280 = vrot.lane.b32.xlu0 %v1276, 124
        %v1281 = vpop.permute.xlu0 %1280
        %1282 = vrot.lane.b32.xlu0 %v1279, 124
        %v1283 = vpop.permute.xlu0 %1282
        %v1286 = vadd.f32 %v1190, %v1281
        %v1287 = vadd.f32 %v1191, %v1283
        %s1288 = sld [smem:[#allocation2 + $0x8e]]
        %v1289 = vstv %s1288
        %v1290 = vmul.f32 %v1289, %v178
        %v1291 = vmul.f32 %v1289, %v179
        %v1292 = vmul.f32 %v1289, %v180
        %v1293 = vmul.f32 %v1289, %v181
        %v1298 = vrot.slane %v1290, 2
        %v1299 = vrot.slane %v1291, 2
        %v1300 = vsel %vm905, %v1298, %v1299
        %v1301 = vrot.slane %v1292, 2
        %v1302 = vrot.slane %v1293, 2
        %v1303 = vsel %vm905, %v1301, %v1302
        %1304 = vrot.lane.b32.xlu0 %v1300, 124
        %v1305 = vpop.permute.xlu0 %1304
        %1306 = vrot.lane.b32.xlu0 %v1303, 124
        %v1307 = vpop.permute.xlu0 %1306
        %v1310 = vadd.f32 %v1214, %v1305
        %v1311 = vadd.f32 %v1215, %v1307
        %s1312 = sld [smem:[#allocation2 + $0x10e]]
        %v1313 = vstv %s1312
        %v1314 = vmul.f32 %v1313, %v178
        %v1315 = vmul.f32 %v1313, %v179
        %v1316 = vmul.f32 %v1313, %v180
        %v1317 = vmul.f32 %v1313, %v181
        %v1322 = vrot.slane %v1314, 2
        %v1323 = vrot.slane %v1315, 2
        %v1324 = vsel %vm905, %v1322, %v1323
        %v1325 = vrot.slane %v1316, 2
        %v1326 = vrot.slane %v1317, 2
        %v1327 = vsel %vm905, %v1325, %v1326
        %1328 = vrot.lane.b32.xlu0 %v1324, 124
        %v1329 = vpop.permute.xlu0 %1328
        %1330 = vrot.lane.b32.xlu0 %v1327, 124
        %v1331 = vpop.permute.xlu0 %1330
        %v1334 = vadd.f32 %v1238, %v1329
        %v1335 = vadd.f32 %v1239, %v1331
        %s1336 = sld [smem:[#allocation2 + $0x18e]]
        %v1337 = vstv %s1336
        %v1338 = vmul.f32 %v1337, %v178
        %v1339 = vmul.f32 %v1337, %v179
        %v1340 = vmul.f32 %v1337, %v180
        %v1341 = vmul.f32 %v1337, %v181
        %v1346 = vrot.slane %v1338, 2
        %v1347 = vrot.slane %v1339, 2
        %v1348 = vsel %vm905, %v1346, %v1347
        %v1349 = vrot.slane %v1340, 2
        %v1350 = vrot.slane %v1341, 2
        %v1351 = vsel %vm905, %v1349, %v1350
        %1352 = vrot.lane.b32.xlu0 %v1348, 124
        %v1353 = vpop.permute.xlu0 %1352
        %1354 = vrot.lane.b32.xlu0 %v1351, 124
        %v1355 = vpop.permute.xlu0 %1354
        %v1358 = vadd.f32 %v1262, %v1353
        %v1359 = vadd.f32 %v1263, %v1355
        %s1360 = sld [smem:[#allocation2 + $0xf]]
        %v1361 = vstv %s1360
        %v1362 = vmul.f32 %v1361, %v178
        %v1363 = vmul.f32 %v1361, %v179
        %v1364 = vmul.f32 %v1361, %v180
        %v1365 = vmul.f32 %v1361, %v181
        %vm1370 = vcmask 1044480
        %v1371 = vrot.slane %v1362, 3
        %v1372 = vrot.slane %v1363, 3
        %v1373 = vsel %vm1370, %v1371, %v1372
        %v1374 = vrot.slane %v1364, 3
        %v1375 = vrot.slane %v1365, 3
        %v1376 = vsel %vm1370, %v1374, %v1375
        %v1379 = vadd.f32 %v1286, %v1373
        %v1380 = vadd.f32 %v1287, %v1376
        %s1381 = sld [smem:[#allocation2 + $0x8f]]
        %v1382 = vstv %s1381
        %v1383 = vmul.f32 %v1382, %v178
        %v1384 = vmul.f32 %v1382, %v179
        %v1385 = vmul.f32 %v1382, %v180
        %v1386 = vmul.f32 %v1382, %v181
        %v1391 = vrot.slane %v1383, 3
        %v1392 = vrot.slane %v1384, 3
        %v1393 = vsel %vm1370, %v1391, %v1392
        %v1394 = vrot.slane %v1385, 3
        %v1395 = vrot.slane %v1386, 3
        %v1396 = vsel %vm1370, %v1394, %v1395
        %v1399 = vadd.f32 %v1310, %v1393
        %v1400 = vadd.f32 %v1311, %v1396
        %s1401 = sld [smem:[#allocation2 + $0x10f]]
        %v1402 = vstv %s1401
        %v1403 = vmul.f32 %v1402, %v178
        %v1404 = vmul.f32 %v1402, %v179
        %v1405 = vmul.f32 %v1402, %v180
        %v1406 = vmul.f32 %v1402, %v181
        %v1411 = vrot.slane %v1403, 3
        %v1412 = vrot.slane %v1404, 3
        %v1413 = vsel %vm1370, %v1411, %v1412
        %v1414 = vrot.slane %v1405, 3
        %v1415 = vrot.slane %v1406, 3
        %v1416 = vsel %vm1370, %v1414, %v1415
        %v1419 = vadd.f32 %v1334, %v1413
        %v1420 = vadd.f32 %v1335, %v1416
        %s1421 = sld [smem:[#allocation2 + $0x18f]]
        %v1422 = vstv %s1421
        %v1423 = vmul.f32 %v1422, %v178
        %v1424 = vmul.f32 %v1422, %v179
        %v1425 = vmul.f32 %v1422, %v180
        %v1426 = vmul.f32 %v1422, %v181
        %v1431 = vrot.slane %v1423, 3
        %v1432 = vrot.slane %v1424, 3
        %v1433 = vsel %vm1370, %v1431, %v1432
        %v1434 = vrot.slane %v1425, 3
        %v1435 = vrot.slane %v1426, 3
        %v1436 = vsel %vm1370, %v1434, %v1435
        %v1439 = vadd.f32 %v1358, %v1433
        %v1440 = vadd.f32 %v1359, %v1436
        %s1441 = sld [smem:[#allocation2 + $0x10]]
        %v1442 = vstv %s1441
        %v1443 = vmul.f32 %v1442, %v178
        %v1444 = vmul.f32 %v1442, %v179
        %v1445 = vmul.f32 %v1442, %v180
        %v1446 = vmul.f32 %v1442, %v181
        %v1451 = vrot.slane %v1443, 3
        %v1452 = vrot.slane %v1444, 3
        %v1453 = vsel %vm1370, %v1451, %v1452
        %v1454 = vrot.slane %v1445, 3
        %v1455 = vrot.slane %v1446, 3
        %v1456 = vsel %vm1370, %v1454, %v1455
        %1457 = vrot.lane.b32.xlu0 %v1453, 127
        %v1458 = vpop.permute.xlu0 %1457
        %1459 = vrot.lane.b32.xlu0 %v1456, 127
        %v1460 = vpop.permute.xlu0 %1459
        %v1463 = vadd.f32 %v1379, %v1458
        %v1464 = vadd.f32 %v1380, %v1460
        %s1465 = sld [smem:[#allocation2 + $0x90]]
        %v1466 = vstv %s1465
        %v1467 = vmul.f32 %v1466, %v178
        %v1468 = vmul.f32 %v1466, %v179
        %v1469 = vmul.f32 %v1466, %v180
        %v1470 = vmul.f32 %v1466, %v181
        %v1475 = vrot.slane %v1467, 3
        %v1476 = vrot.slane %v1468, 3
        %v1477 = vsel %vm1370, %v1475, %v1476
        %v1478 = vrot.slane %v1469, 3
        %v1479 = vrot.slane %v1470, 3
        %v1480 = vsel %vm1370, %v1478, %v1479
        %1481 = vrot.lane.b32.xlu0 %v1477, 127
        %v1482 = vpop.permute.xlu0 %1481
        %1483 = vrot.lane.b32.xlu0 %v1480, 127
        %v1484 = vpop.permute.xlu0 %1483
        %v1487 = vadd.f32 %v1399, %v1482
        %v1488 = vadd.f32 %v1400, %v1484
        %s1489 = sld [smem:[#allocation2 + $0x110]]
        %v1490 = vstv %s1489
        %v1491 = vmul.f32 %v1490, %v178
        %v1492 = vmul.f32 %v1490, %v179
        %v1493 = vmul.f32 %v1490, %v180
        %v1494 = vmul.f32 %v1490, %v181
        %v1499 = vrot.slane %v1491, 3
        %v1500 = vrot.slane %v1492, 3
        %v1501 = vsel %vm1370, %v1499, %v1500
        %v1502 = vrot.slane %v1493, 3
        %v1503 = vrot.slane %v1494, 3
        %v1504 = vsel %vm1370, %v1502, %v1503
        %1505 = vrot.lane.b32.xlu0 %v1501, 127
        %v1506 = vpop.permute.xlu0 %1505
        %1507 = vrot.lane.b32.xlu0 %v1504, 127
        %v1508 = vpop.permute.xlu0 %1507
        %v1511 = vadd.f32 %v1419, %v1506
        %v1512 = vadd.f32 %v1420, %v1508
        %s1513 = sld [smem:[#allocation2 + $0x190]]
        %v1514 = vstv %s1513
        %v1515 = vmul.f32 %v1514, %v178
        %v1516 = vmul.f32 %v1514, %v179
        %v1517 = vmul.f32 %v1514, %v180
        %v1518 = vmul.f32 %v1514, %v181
        %v1523 = vrot.slane %v1515, 3
        %v1524 = vrot.slane %v1516, 3
        %v1525 = vsel %vm1370, %v1523, %v1524
        %v1526 = vrot.slane %v1517, 3
        %v1527 = vrot.slane %v1518, 3
        %v1528 = vsel %vm1370, %v1526, %v1527
        %1529 = vrot.lane.b32.xlu0 %v1525, 127
        %v1530 = vpop.permute.xlu0 %1529
        %1531 = vrot.lane.b32.xlu0 %v1528, 127
        %v1532 = vpop.permute.xlu0 %1531
        %v1535 = vadd.f32 %v1439, %v1530
        %v1536 = vadd.f32 %v1440, %v1532
        %s1537 = sld [smem:[#allocation2 + $0x11]]
        %v1538 = vstv %s1537
        %v1539 = vmul.f32 %v1538, %v178
        %v1540 = vmul.f32 %v1538, %v179
        %v1541 = vmul.f32 %v1538, %v180
        %v1542 = vmul.f32 %v1538, %v181
        %v1547 = vrot.slane %v1539, 3
        %v1548 = vrot.slane %v1540, 3
        %v1549 = vsel %vm1370, %v1547, %v1548
        %v1550 = vrot.slane %v1541, 3
        %v1551 = vrot.slane %v1542, 3
        %v1552 = vsel %vm1370, %v1550, %v1551
        %1553 = vrot.lane.b32.xlu0 %v1549, 126
        %v1554 = vpop.permute.xlu0 %1553
        %1555 = vrot.lane.b32.xlu0 %v1552, 126
        %v1556 = vpop.permute.xlu0 %1555
        %v1559 = vadd.f32 %v1463, %v1554
        %v1560 = vadd.f32 %v1464, %v1556
        %s1561 = sld [smem:[#allocation2 + $0x91]]
        %v1562 = vstv %s1561
        %v1563 = vmul.f32 %v1562, %v178
        %v1564 = vmul.f32 %v1562, %v179
        %v1565 = vmul.f32 %v1562, %v180
        %v1566 = vmul.f32 %v1562, %v181
        %v1571 = vrot.slane %v1563, 3
        %v1572 = vrot.slane %v1564, 3
        %v1573 = vsel %vm1370, %v1571, %v1572
        %v1574 = vrot.slane %v1565, 3
        %v1575 = vrot.slane %v1566, 3
        %v1576 = vsel %vm1370, %v1574, %v1575
        %1577 = vrot.lane.b32.xlu0 %v1573, 126
        %v1578 = vpop.permute.xlu0 %1577
        %1579 = vrot.lane.b32.xlu0 %v1576, 126
        %v1580 = vpop.permute.xlu0 %1579
        %v1583 = vadd.f32 %v1487, %v1578
        %v1584 = vadd.f32 %v1488, %v1580
        %s1585 = sld [smem:[#allocation2 + $0x111]]
        %v1586 = vstv %s1585
        %v1587 = vmul.f32 %v1586, %v178
        %v1588 = vmul.f32 %v1586, %v179
        %v1589 = vmul.f32 %v1586, %v180
        %v1590 = vmul.f32 %v1586, %v181
        %v1595 = vrot.slane %v1587, 3
        %v1596 = vrot.slane %v1588, 3
        %v1597 = vsel %vm1370, %v1595, %v1596
        %v1598 = vrot.slane %v1589, 3
        %v1599 = vrot.slane %v1590, 3
        %v1600 = vsel %vm1370, %v1598, %v1599
        %1601 = vrot.lane.b32.xlu0 %v1597, 126
        %v1602 = vpop.permute.xlu0 %1601
        %1603 = vrot.lane.b32.xlu0 %v1600, 126
        %v1604 = vpop.permute.xlu0 %1603
        %v1607 = vadd.f32 %v1511, %v1602
        %v1608 = vadd.f32 %v1512, %v1604
        %s1609 = sld [smem:[#allocation2 + $0x191]]
        %v1610 = vstv %s1609
        %v1611 = vmul.f32 %v1610, %v178
        %v1612 = vmul.f32 %v1610, %v179
        %v1613 = vmul.f32 %v1610, %v180
        %v1614 = vmul.f32 %v1610, %v181
        %v1619 = vrot.slane %v1611, 3
        %v1620 = vrot.slane %v1612, 3
        %v1621 = vsel %vm1370, %v1619, %v1620
        %v1622 = vrot.slane %v1613, 3
        %v1623 = vrot.slane %v1614, 3
        %v1624 = vsel %vm1370, %v1622, %v1623
        %1625 = vrot.lane.b32.xlu0 %v1621, 126
        %v1626 = vpop.permute.xlu0 %1625
        %1627 = vrot.lane.b32.xlu0 %v1624, 126
        %v1628 = vpop.permute.xlu0 %1627
        %v1631 = vadd.f32 %v1535, %v1626
        %v1632 = vadd.f32 %v1536, %v1628
        %s1633 = sld [smem:[#allocation2 + $0x12]]
        %v1634 = vstv %s1633
        %v1635 = vmul.f32 %v1634, %v178
        %v1636 = vmul.f32 %v1634, %v179
        %v1637 = vmul.f32 %v1634, %v180
        %v1638 = vmul.f32 %v1634, %v181
        %v1643 = vrot.slane %v1635, 3
        %v1644 = vrot.slane %v1636, 3
        %v1645 = vsel %vm1370, %v1643, %v1644
        %v1646 = vrot.slane %v1637, 3
        %v1647 = vrot.slane %v1638, 3
        %v1648 = vsel %vm1370, %v1646, %v1647
        %1649 = vrot.lane.b32.xlu0 %v1645, 125
        %v1650 = vpop.permute.xlu0 %1649
        %1651 = vrot.lane.b32.xlu0 %v1648, 125
        %v1652 = vpop.permute.xlu0 %1651
        %v1655 = vadd.f32 %v1559, %v1650
        %v1656 = vadd.f32 %v1560, %v1652
        %s1657 = sld [smem:[#allocation2 + $0x92]]
        %v1658 = vstv %s1657
        %v1659 = vmul.f32 %v1658, %v178
        %v1660 = vmul.f32 %v1658, %v179
        %v1661 = vmul.f32 %v1658, %v180
        %v1662 = vmul.f32 %v1658, %v181
        %v1667 = vrot.slane %v1659, 3
        %v1668 = vrot.slane %v1660, 3
        %v1669 = vsel %vm1370, %v1667, %v1668
        %v1670 = vrot.slane %v1661, 3
        %v1671 = vrot.slane %v1662, 3
        %v1672 = vsel %vm1370, %v1670, %v1671
        %1673 = vrot.lane.b32.xlu0 %v1669, 125
        %v1674 = vpop.permute.xlu0 %1673
        %1675 = vrot.lane.b32.xlu0 %v1672, 125
        %v1676 = vpop.permute.xlu0 %1675
        %v1679 = vadd.f32 %v1583, %v1674
        %v1680 = vadd.f32 %v1584, %v1676
        %s1681 = sld [smem:[#allocation2 + $0x112]]
        %v1682 = vstv %s1681
        %v1683 = vmul.f32 %v1682, %v178
        %v1684 = vmul.f32 %v1682, %v179
        %v1685 = vmul.f32 %v1682, %v180
        %v1686 = vmul.f32 %v1682, %v181
        %v1691 = vrot.slane %v1683, 3
        %v1692 = vrot.slane %v1684, 3
        %v1693 = vsel %vm1370, %v1691, %v1692
        %v1694 = vrot.slane %v1685, 3
        %v1695 = vrot.slane %v1686, 3
        %v1696 = vsel %vm1370, %v1694, %v1695
        %1697 = vrot.lane.b32.xlu0 %v1693, 125
        %v1698 = vpop.permute.xlu0 %1697
        %1699 = vrot.lane.b32.xlu0 %v1696, 125
        %v1700 = vpop.permute.xlu0 %1699
        %v1703 = vadd.f32 %v1607, %v1698
        %v1704 = vadd.f32 %v1608, %v1700
        %s1705 = sld [smem:[#allocation2 + $0x192]]
        %v1706 = vstv %s1705
        %v1707 = vmul.f32 %v1706, %v178
        %v1708 = vmul.f32 %v1706, %v179
        %v1709 = vmul.f32 %v1706, %v180
        %v1710 = vmul.f32 %v1706, %v181
        %v1715 = vrot.slane %v1707, 3
        %v1716 = vrot.slane %v1708, 3
        %v1717 = vsel %vm1370, %v1715, %v1716
        %v1718 = vrot.slane %v1709, 3
        %v1719 = vrot.slane %v1710, 3
        %v1720 = vsel %vm1370, %v1718, %v1719
        %1721 = vrot.lane.b32.xlu0 %v1717, 125
        %v1722 = vpop.permute.xlu0 %1721
        %1723 = vrot.lane.b32.xlu0 %v1720, 125
        %v1724 = vpop.permute.xlu0 %1723
        %v1727 = vadd.f32 %v1631, %v1722
        %v1728 = vadd.f32 %v1632, %v1724
        %s1729 = sld [smem:[#allocation2 + $0x13]]
        %v1730 = vstv %s1729
        %v1731 = vmul.f32 %v1730, %v178
        %v1732 = vmul.f32 %v1730, %v179
        %v1733 = vmul.f32 %v1730, %v180
        %v1734 = vmul.f32 %v1730, %v181
        %v1739 = vrot.slane %v1731, 3
        %v1740 = vrot.slane %v1732, 3
        %v1741 = vsel %vm1370, %v1739, %v1740
        %v1742 = vrot.slane %v1733, 3
        %v1743 = vrot.slane %v1734, 3
        %v1744 = vsel %vm1370, %v1742, %v1743
        %1745 = vrot.lane.b32.xlu0 %v1741, 124
        %v1746 = vpop.permute.xlu0 %1745
        %1747 = vrot.lane.b32.xlu0 %v1744, 124
        %v1748 = vpop.permute.xlu0 %1747
        %v1751 = vadd.f32 %v1655, %v1746
        %v1752 = vadd.f32 %v1656, %v1748
        %s1753 = sld [smem:[#allocation2 + $0x93]]
        %v1754 = vstv %s1753
        %v1755 = vmul.f32 %v1754, %v178
        %v1756 = vmul.f32 %v1754, %v179
        %v1757 = vmul.f32 %v1754, %v180
        %v1758 = vmul.f32 %v1754, %v181
        %v1763 = vrot.slane %v1755, 3
        %v1764 = vrot.slane %v1756, 3
        %v1765 = vsel %vm1370, %v1763, %v1764
        %v1766 = vrot.slane %v1757, 3
        %v1767 = vrot.slane %v1758, 3
        %v1768 = vsel %vm1370, %v1766, %v1767
        %1769 = vrot.lane.b32.xlu0 %v1765, 124
        %v1770 = vpop.permute.xlu0 %1769
        %1771 = vrot.lane.b32.xlu0 %v1768, 124
        %v1772 = vpop.permute.xlu0 %1771
        %v1775 = vadd.f32 %v1679, %v1770
        %v1776 = vadd.f32 %v1680, %v1772
        %s1777 = sld [smem:[#allocation2 + $0x113]]
        %v1778 = vstv %s1777
        %v1779 = vmul.f32 %v1778, %v178
        %v1780 = vmul.f32 %v1778, %v179
        %v1781 = vmul.f32 %v1778, %v180
        %v1782 = vmul.f32 %v1778, %v181
        %v1787 = vrot.slane %v1779, 3
        %v1788 = vrot.slane %v1780, 3
        %v1789 = vsel %vm1370, %v1787, %v1788
        %v1790 = vrot.slane %v1781, 3
        %v1791 = vrot.slane %v1782, 3
        %v1792 = vsel %vm1370, %v1790, %v1791
        %1793 = vrot.lane.b32.xlu0 %v1789, 124
        %v1794 = vpop.permute.xlu0 %1793
        %1795 = vrot.lane.b32.xlu0 %v1792, 124
        %v1796 = vpop.permute.xlu0 %1795
        %v1799 = vadd.f32 %v1703, %v1794
        %v1800 = vadd.f32 %v1704, %v1796
        %s1801 = sld [smem:[#allocation2 + $0x193]]
        %v1802 = vstv %s1801
        %v1803 = vmul.f32 %v1802, %v178
        %v1804 = vmul.f32 %v1802, %v179
        %v1805 = vmul.f32 %v1802, %v180
        %v1806 = vmul.f32 %v1802, %v181
        %v1811 = vrot.slane %v1803, 3
        %v1812 = vrot.slane %v1804, 3
        %v1813 = vsel %vm1370, %v1811, %v1812
        %v1814 = vrot.slane %v1805, 3
        %v1815 = vrot.slane %v1806, 3
        %v1816 = vsel %vm1370, %v1814, %v1815
        %1817 = vrot.lane.b32.xlu0 %v1813, 124
        %v1818 = vpop.permute.xlu0 %1817
        %1819 = vrot.lane.b32.xlu0 %v1816, 124
        %v1820 = vpop.permute.xlu0 %1819
        %v1823 = vadd.f32 %v1727, %v1818
        %v1824 = vadd.f32 %v1728, %v1820
        %s1825 = sld [smem:[#allocation2 + $0x14]]
        %v1826 = vstv %s1825
        %v1827 = vmul.f32 %v1826, %v178
        %v1828 = vmul.f32 %v1826, %v179
        %v1829 = vmul.f32 %v1826, %v180
        %v1830 = vmul.f32 %v1826, %v181
        %vm1835 = vcmask 1043456
        %v1836 = vrot.slane %v1827, 4
        %v1837 = vrot.slane %v1828, 4
        %v1838 = vsel %vm1835, %v1836, %v1837
        %v1839 = vrot.slane %v1829, 4
        %v1840 = vrot.slane %v1830, 4
        %v1841 = vsel %vm1835, %v1839, %v1840
        %v1844 = vadd.f32 %v1751, %v1838
        %v1845 = vadd.f32 %v1752, %v1841
        %s1846 = sld [smem:[#allocation2 + $0x94]]
        %v1847 = vstv %s1846
        %v1848 = vmul.f32 %v1847, %v178
        %v1849 = vmul.f32 %v1847, %v179
        %v1850 = vmul.f32 %v1847, %v180
        %v1851 = vmul.f32 %v1847, %v181
        %v1856 = vrot.slane %v1848, 4
        %v1857 = vrot.slane %v1849, 4
        %v1858 = vsel %vm1835, %v1856, %v1857
        %v1859 = vrot.slane %v1850, 4
        %v1860 = vrot.slane %v1851, 4
        %v1861 = vsel %vm1835, %v1859, %v1860
        %v1864 = vadd.f32 %v1775, %v1858
        %v1865 = vadd.f32 %v1776, %v1861
        %s1866 = sld [smem:[#allocation2 + $0x114]]
        %v1867 = vstv %s1866
        %v1868 = vmul.f32 %v1867, %v178
        %v1869 = vmul.f32 %v1867, %v179
        %v1870 = vmul.f32 %v1867, %v180
        %v1871 = vmul.f32 %v1867, %v181
        %v1876 = vrot.slane %v1868, 4
        %v1877 = vrot.slane %v1869, 4
        %v1878 = vsel %vm1835, %v1876, %v1877
        %v1879 = vrot.slane %v1870, 4
        %v1880 = vrot.slane %v1871, 4
        %v1881 = vsel %vm1835, %v1879, %v1880
        %v1884 = vadd.f32 %v1799, %v1878
        %v1885 = vadd.f32 %v1800, %v1881
        %s1886 = sld [smem:[#allocation2 + $0x194]]
        %v1887 = vstv %s1886
        %v1888 = vmul.f32 %v1887, %v178
        %v1889 = vmul.f32 %v1887, %v179
        %v1890 = vmul.f32 %v1887, %v180
        %v1891 = vmul.f32 %v1887, %v181
        %v1896 = vrot.slane %v1888, 4
        %v1897 = vrot.slane %v1889, 4
        %v1898 = vsel %vm1835, %v1896, %v1897
        %v1899 = vrot.slane %v1890, 4
        %v1900 = vrot.slane %v1891, 4
        %v1901 = vsel %vm1835, %v1899, %v1900
        %v1904 = vadd.f32 %v1823, %v1898
        %v1905 = vadd.f32 %v1824, %v1901
        %s1906 = sld [smem:[#allocation2 + $0x15]]
        %v1907 = vstv %s1906
        %v1908 = vmul.f32 %v1907, %v178
        %v1909 = vmul.f32 %v1907, %v179
        %v1910 = vmul.f32 %v1907, %v180
        %v1911 = vmul.f32 %v1907, %v181
        %v1916 = vrot.slane %v1908, 4
        %v1917 = vrot.slane %v1909, 4
        %v1918 = vsel %vm1835, %v1916, %v1917
        %v1919 = vrot.slane %v1910, 4
        %v1920 = vrot.slane %v1911, 4
        %v1921 = vsel %vm1835, %v1919, %v1920
        %1922 = vrot.lane.b32.xlu0 %v1918, 127
        %v1923 = vpop.permute.xlu0 %1922
        %1924 = vrot.lane.b32.xlu0 %v1921, 127
        %v1925 = vpop.permute.xlu0 %1924
        %v1928 = vadd.f32 %v1844, %v1923
        %v1929 = vadd.f32 %v1845, %v1925
        %s1930 = sld [smem:[#allocation2 + $0x95]]
        %v1931 = vstv %s1930
        %v1932 = vmul.f32 %v1931, %v178
        %v1933 = vmul.f32 %v1931, %v179
        %v1934 = vmul.f32 %v1931, %v180
        %v1935 = vmul.f32 %v1931, %v181
        %v1940 = vrot.slane %v1932, 4
        %v1941 = vrot.slane %v1933, 4
        %v1942 = vsel %vm1835, %v1940, %v1941
        %v1943 = vrot.slane %v1934, 4
        %v1944 = vrot.slane %v1935, 4
        %v1945 = vsel %vm1835, %v1943, %v1944
        %1946 = vrot.lane.b32.xlu0 %v1942, 127
        %v1947 = vpop.permute.xlu0 %1946
        %1948 = vrot.lane.b32.xlu0 %v1945, 127
        %v1949 = vpop.permute.xlu0 %1948
        %v1952 = vadd.f32 %v1864, %v1947
        %v1953 = vadd.f32 %v1865, %v1949
        %s1954 = sld [smem:[#allocation2 + $0x115]]
        %v1955 = vstv %s1954
        %v1956 = vmul.f32 %v1955, %v178
        %v1957 = vmul.f32 %v1955, %v179
        %v1958 = vmul.f32 %v1955, %v180
        %v1959 = vmul.f32 %v1955, %v181
        %v1964 = vrot.slane %v1956, 4
        %v1965 = vrot.slane %v1957, 4
        %v1966 = vsel %vm1835, %v1964, %v1965
        %v1967 = vrot.slane %v1958, 4
        %v1968 = vrot.slane %v1959, 4
        %v1969 = vsel %vm1835, %v1967, %v1968
        %1970 = vrot.lane.b32.xlu0 %v1966, 127
        %v1971 = vpop.permute.xlu0 %1970
        %1972 = vrot.lane.b32.xlu0 %v1969, 127
        %v1973 = vpop.permute.xlu0 %1972
        %v1976 = vadd.f32 %v1884, %v1971
        %v1977 = vadd.f32 %v1885, %v1973
        %s1978 = sld [smem:[#allocation2 + $0x195]]
        %v1979 = vstv %s1978
        %v1980 = vmul.f32 %v1979, %v178
        %v1981 = vmul.f32 %v1979, %v179
        %v1982 = vmul.f32 %v1979, %v180
        %v1983 = vmul.f32 %v1979, %v181
        %v1988 = vrot.slane %v1980, 4
        %v1989 = vrot.slane %v1981, 4
        %v1990 = vsel %vm1835, %v1988, %v1989
        %v1991 = vrot.slane %v1982, 4
        %v1992 = vrot.slane %v1983, 4
        %v1993 = vsel %vm1835, %v1991, %v1992
        %1994 = vrot.lane.b32.xlu0 %v1990, 127
        %v1995 = vpop.permute.xlu0 %1994
        %1996 = vrot.lane.b32.xlu0 %v1993, 127
        %v1997 = vpop.permute.xlu0 %1996
        %v2000 = vadd.f32 %v1904, %v1995
        %v2001 = vadd.f32 %v1905, %v1997
        %s2002 = sld [smem:[#allocation2 + $0x16]]
        %v2003 = vstv %s2002
        %v2004 = vmul.f32 %v2003, %v178
        %v2005 = vmul.f32 %v2003, %v179
        %v2006 = vmul.f32 %v2003, %v180
        %v2007 = vmul.f32 %v2003, %v181
        %v2012 = vrot.slane %v2004, 4
        %v2013 = vrot.slane %v2005, 4
        %v2014 = vsel %vm1835, %v2012, %v2013
        %v2015 = vrot.slane %v2006, 4
        %v2016 = vrot.slane %v2007, 4
        %v2017 = vsel %vm1835, %v2015, %v2016
        %2018 = vrot.lane.b32.xlu0 %v2014, 126
        %v2019 = vpop.permute.xlu0 %2018
        %2020 = vrot.lane.b32.xlu0 %v2017, 126
        %v2021 = vpop.permute.xlu0 %2020
        %v2024 = vadd.f32 %v1928, %v2019
        %v2025 = vadd.f32 %v1929, %v2021
        %s2026 = sld [smem:[#allocation2 + $0x96]]
        %v2027 = vstv %s2026
        %v2028 = vmul.f32 %v2027, %v178
        %v2029 = vmul.f32 %v2027, %v179
        %v2030 = vmul.f32 %v2027, %v180
        %v2031 = vmul.f32 %v2027, %v181
        %v2036 = vrot.slane %v2028, 4
        %v2037 = vrot.slane %v2029, 4
        %v2038 = vsel %vm1835, %v2036, %v2037
        %v2039 = vrot.slane %v2030, 4
        %v2040 = vrot.slane %v2031, 4
        %v2041 = vsel %vm1835, %v2039, %v2040
        %2042 = vrot.lane.b32.xlu0 %v2038, 126
        %v2043 = vpop.permute.xlu0 %2042
        %2044 = vrot.lane.b32.xlu0 %v2041, 126
        %v2045 = vpop.permute.xlu0 %2044
        %v2048 = vadd.f32 %v1952, %v2043
        %v2049 = vadd.f32 %v1953, %v2045
        %s2050 = sld [smem:[#allocation2 + $0x116]]
        %v2051 = vstv %s2050
        %v2052 = vmul.f32 %v2051, %v178
        %v2053 = vmul.f32 %v2051, %v179
        %v2054 = vmul.f32 %v2051, %v180
        %v2055 = vmul.f32 %v2051, %v181
        %v2060 = vrot.slane %v2052, 4
        %v2061 = vrot.slane %v2053, 4
        %v2062 = vsel %vm1835, %v2060, %v2061
        %v2063 = vrot.slane %v2054, 4
        %v2064 = vrot.slane %v2055, 4
        %v2065 = vsel %vm1835, %v2063, %v2064
        %2066 = vrot.lane.b32.xlu0 %v2062, 126
        %v2067 = vpop.permute.xlu0 %2066
        %2068 = vrot.lane.b32.xlu0 %v2065, 126
        %v2069 = vpop.permute.xlu0 %2068
        %v2072 = vadd.f32 %v1976, %v2067
        %v2073 = vadd.f32 %v1977, %v2069
        %s2074 = sld [smem:[#allocation2 + $0x196]]
        %v2075 = vstv %s2074
        %v2076 = vmul.f32 %v2075, %v178
        %v2077 = vmul.f32 %v2075, %v179
        %v2078 = vmul.f32 %v2075, %v180
        %v2079 = vmul.f32 %v2075, %v181
        %v2084 = vrot.slane %v2076, 4
        %v2085 = vrot.slane %v2077, 4
        %v2086 = vsel %vm1835, %v2084, %v2085
        %v2087 = vrot.slane %v2078, 4
        %v2088 = vrot.slane %v2079, 4
        %v2089 = vsel %vm1835, %v2087, %v2088
        %2090 = vrot.lane.b32.xlu0 %v2086, 126
        %v2091 = vpop.permute.xlu0 %2090
        %2092 = vrot.lane.b32.xlu0 %v2089, 126
        %v2093 = vpop.permute.xlu0 %2092
        %v2096 = vadd.f32 %v2000, %v2091
        %v2097 = vadd.f32 %v2001, %v2093
        %s2098 = sld [smem:[#allocation2 + $0x17]]
        %v2099 = vstv %s2098
        %v2100 = vmul.f32 %v2099, %v178
        %v2101 = vmul.f32 %v2099, %v179
        %v2102 = vmul.f32 %v2099, %v180
        %v2103 = vmul.f32 %v2099, %v181
        %v2108 = vrot.slane %v2100, 4
        %v2109 = vrot.slane %v2101, 4
        %v2110 = vsel %vm1835, %v2108, %v2109
        %v2111 = vrot.slane %v2102, 4
        %v2112 = vrot.slane %v2103, 4
        %v2113 = vsel %vm1835, %v2111, %v2112
        %2114 = vrot.lane.b32.xlu0 %v2110, 125
        %v2115 = vpop.permute.xlu0 %2114
        %2116 = vrot.lane.b32.xlu0 %v2113, 125
        %v2117 = vpop.permute.xlu0 %2116
        %v2120 = vadd.f32 %v2024, %v2115
        %v2121 = vadd.f32 %v2025, %v2117
        %s2122 = sld [smem:[#allocation2 + $0x97]]
        %v2123 = vstv %s2122
        %v2124 = vmul.f32 %v2123, %v178
        %v2125 = vmul.f32 %v2123, %v179
        %v2126 = vmul.f32 %v2123, %v180
        %v2127 = vmul.f32 %v2123, %v181
        %v2132 = vrot.slane %v2124, 4
        %v2133 = vrot.slane %v2125, 4
        %v2134 = vsel %vm1835, %v2132, %v2133
        %v2135 = vrot.slane %v2126, 4
        %v2136 = vrot.slane %v2127, 4
        %v2137 = vsel %vm1835, %v2135, %v2136
        %2138 = vrot.lane.b32.xlu0 %v2134, 125
        %v2139 = vpop.permute.xlu0 %2138
        %2140 = vrot.lane.b32.xlu0 %v2137, 125
        %v2141 = vpop.permute.xlu0 %2140
        %v2144 = vadd.f32 %v2048, %v2139
        %v2145 = vadd.f32 %v2049, %v2141
        %s2146 = sld [smem:[#allocation2 + $0x117]]
        %v2147 = vstv %s2146
        %v2148 = vmul.f32 %v2147, %v178
        %v2149 = vmul.f32 %v2147, %v179
        %v2150 = vmul.f32 %v2147, %v180
        %v2151 = vmul.f32 %v2147, %v181
        %v2156 = vrot.slane %v2148, 4
        %v2157 = vrot.slane %v2149, 4
        %v2158 = vsel %vm1835, %v2156, %v2157
        %v2159 = vrot.slane %v2150, 4
        %v2160 = vrot.slane %v2151, 4
        %v2161 = vsel %vm1835, %v2159, %v2160
        %2162 = vrot.lane.b32.xlu0 %v2158, 125
        %v2163 = vpop.permute.xlu0 %2162
        %2164 = vrot.lane.b32.xlu0 %v2161, 125
        %v2165 = vpop.permute.xlu0 %2164
        %v2168 = vadd.f32 %v2072, %v2163
        %v2169 = vadd.f32 %v2073, %v2165
        %s2170 = sld [smem:[#allocation2 + $0x197]]
        %v2171 = vstv %s2170
        %v2172 = vmul.f32 %v2171, %v178
        %v2173 = vmul.f32 %v2171, %v179
        %v2174 = vmul.f32 %v2171, %v180
        %v2175 = vmul.f32 %v2171, %v181
        %v2180 = vrot.slane %v2172, 4
        %v2181 = vrot.slane %v2173, 4
        %v2182 = vsel %vm1835, %v2180, %v2181
        %v2183 = vrot.slane %v2174, 4
        %v2184 = vrot.slane %v2175, 4
        %v2185 = vsel %vm1835, %v2183, %v2184
        %2186 = vrot.lane.b32.xlu0 %v2182, 125
        %v2187 = vpop.permute.xlu0 %2186
        %2188 = vrot.lane.b32.xlu0 %v2185, 125
        %v2189 = vpop.permute.xlu0 %2188
        %v2192 = vadd.f32 %v2096, %v2187
        %v2193 = vadd.f32 %v2097, %v2189
        %s2194 = sld [smem:[#allocation2 + $0x18]]
        %v2195 = vstv %s2194
        %v2196 = vmul.f32 %v2195, %v178
        %v2197 = vmul.f32 %v2195, %v179
        %v2198 = vmul.f32 %v2195, %v180
        %v2199 = vmul.f32 %v2195, %v181
        %v2204 = vrot.slane %v2196, 4
        %v2205 = vrot.slane %v2197, 4
        %v2206 = vsel %vm1835, %v2204, %v2205
        %v2207 = vrot.slane %v2198, 4
        %v2208 = vrot.slane %v2199, 4
        %v2209 = vsel %vm1835, %v2207, %v2208
        %2210 = vrot.lane.b32.xlu0 %v2206, 124
        %v2211 = vpop.permute.xlu0 %2210
        %2212 = vrot.lane.b32.xlu0 %v2209, 124
        %v2213 = vpop.permute.xlu0 %2212
        %v2216 = vadd.f32 %v2120, %v2211
        %v2217 = vadd.f32 %v2121, %v2213
        %s2218 = sld [smem:[#allocation2 + $0x98]]
        %v2219 = vstv %s2218
        %v2220 = vmul.f32 %v2219, %v178
        %v2221 = vmul.f32 %v2219, %v179
        %v2222 = vmul.f32 %v2219, %v180
        %v2223 = vmul.f32 %v2219, %v181
        %v2228 = vrot.slane %v2220, 4
        %v2229 = vrot.slane %v2221, 4
        %v2230 = vsel %vm1835, %v2228, %v2229
        %v2231 = vrot.slane %v2222, 4
        %v2232 = vrot.slane %v2223, 4
        %v2233 = vsel %vm1835, %v2231, %v2232
        %2234 = vrot.lane.b32.xlu0 %v2230, 124
        %v2235 = vpop.permute.xlu0 %2234
        %2236 = vrot.lane.b32.xlu0 %v2233, 124
        %v2237 = vpop.permute.xlu0 %2236
        %v2240 = vadd.f32 %v2144, %v2235
        %v2241 = vadd.f32 %v2145, %v2237
        %s2242 = sld [smem:[#allocation2 + $0x118]]
        %v2243 = vstv %s2242
        %v2244 = vmul.f32 %v2243, %v178
        %v2245 = vmul.f32 %v2243, %v179
        %v2246 = vmul.f32 %v2243, %v180
        %v2247 = vmul.f32 %v2243, %v181
        %v2252 = vrot.slane %v2244, 4
        %v2253 = vrot.slane %v2245, 4
        %v2254 = vsel %vm1835, %v2252, %v2253
        %v2255 = vrot.slane %v2246, 4
        %v2256 = vrot.slane %v2247, 4
        %v2257 = vsel %vm1835, %v2255, %v2256
        %2258 = vrot.lane.b32.xlu0 %v2254, 124
        %v2259 = vpop.permute.xlu0 %2258
        %2260 = vrot.lane.b32.xlu0 %v2257, 124
        %v2261 = vpop.permute.xlu0 %2260
        %v2264 = vadd.f32 %v2168, %v2259
        %v2265 = vadd.f32 %v2169, %v2261
        %s2266 = sld [smem:[#allocation2 + $0x198]]
        %v2267 = vstv %s2266
        %v2268 = vmul.f32 %v2267, %v178
        %v2269 = vmul.f32 %v2267, %v179
        %v2270 = vmul.f32 %v2267, %v180
        %v2271 = vmul.f32 %v2267, %v181
        %v2276 = vrot.slane %v2268, 4
        %v2277 = vrot.slane %v2269, 4
        %v2278 = vsel %vm1835, %v2276, %v2277
        %v2279 = vrot.slane %v2270, 4
        %v2280 = vrot.slane %v2271, 4
        %v2281 = vsel %vm1835, %v2279, %v2280
        %2282 = vrot.lane.b32.xlu0 %v2278, 124
        %v2283 = vpop.permute.xlu0 %2282
        %2284 = vrot.lane.b32.xlu0 %v2281, 124
        %v2285 = vpop.permute.xlu0 %2284
        %v2288 = vadd.f32 %v2192, %v2283
        %v2289 = vadd.f32 %v2193, %v2285
        %vm2290 = vcmask 130048
        %2291 = vst.msk [vmem:[%s167] sm:$0xff] %vm2290, %v2216
        %2292 = vst.msk [vmem:[%s167 + $0x20] sm:$0xff] %vm2290, %v2217
        %s2293 = scalar_lea.vmem %s167, 8 [#allocation5]
        %2294 = vst.msk [vmem:[%s2293] sm:$0xff] %vm2290, %v2240
        %2295 = vst.msk [vmem:[%s2293 + $0x20] sm:$0xff] %vm2290, %v2241
        %s2296 = scalar_lea.vmem %s167, 16 [#allocation5]
        %2297 = vst.msk [vmem:[%s2296] sm:$0xff] %vm2290, %v2264
        %2298 = vst.msk [vmem:[%s2296 + $0x20] sm:$0xff] %vm2290, %v2265
        %s2299 = scalar_lea.vmem %s167, 24 [#allocation5]
        %2300 = vst.msk [vmem:[%s2299] sm:$0xff] %vm2290, %v2288
        %2301 = vst.msk [vmem:[%s2299 + $0x20] sm:$0xff] %vm2290, %v2289
        %s2302 = sand.u32 %s86, 1
        %s2303 = scalar_lea.sflag [#allocation3], %s2302
        %s2304 = sand.u32 %s86, 1
        %s2305 = smul.addr %s2304, 64
        %s2306 = scalar_lea.vmem [#allocation5], %s2305
        // Predicated region
        $region33: #{tpu_custom_call.1} parent=27 // pred_check
          %p2307 = pneg %p96
        $region34: #{tpu_custom_call.1} parent=27 // pred_check_branch
          %2309 = sbr.rel (%p2307) target = $region36
        $region35: #{tpu_custom_call.1} parent=27 // pred_region
          %s2310 = smul.u32 2, %s21
          %s2312 = ssub.s32 1024, 1024
          %2313 = vsyncadd %s2303, %s2312
          %s2314 = smul.addr %s2310, 8
          %s2315 = sadd.s32 %s22, %s2314
          %s2316 = smul.addr %s2315, 128
          %s2317 = scalar_lea.hbm %s2, %s2316
          %s2318 = sshll.u32 %s2306, 4
          %s2319 = int_to_ptr.vmem [resolvable:$true] %s2318
          %2324 = dma.vmem_to_hbm [thread:$0]  %s2319, 1024, %s2317, %s2303, 128, 256, 8
        $region36: #{tpu_custom_call.1} parent=27 // pred_fallthru
          _
      $region28: #{tpu_custom_call.1} parent=5 // pred_fallthru
        _
      %p2325 = scmp.le.s32.totalorder 2, %s12
      // Predicated region
      $region37: #{tpu_custom_call.1} parent=5 // pred_check
        %p2326 = pneg %p2325
      $region38: #{tpu_custom_call.1} parent=5 // pred_check_branch
        %2328 = sbr.rel (%p2326) target = $region40
      $region39: #{tpu_custom_call.1} parent=5 // pred_region
        %s2329 = ssub.s32 %s12, 2
        // Predicated region
        $region41: #{tpu_custom_call.1} parent=39 // pred_check
          %p2330 = pneg %p102
        $region42: #{tpu_custom_call.1} parent=39 // pred_check_branch
          %2332 = sbr.rel (%p2330) target = $region44
        $region43: #{tpu_custom_call.1} parent=39 // pred_region
          %s2333 = sand.u32 %s87, 1
          %s2334 = scalar_lea.sflag [#allocation3], %s2333
          %s2335 = sand.u32 %s87, 1
          %s2336 = smul.addr %s2335, 64
          %s2337 = scalar_lea.vmem [#allocation5], %s2336
          %2338 = dma.done %s2334, 1024
        $region44: #{tpu_custom_call.1} parent=39 // pred_fallthru
          _
      $region40: #{tpu_custom_call.1} parent=5 // pred_fallthru
        _
    $region6: #{tpu_custom_call.1} parent=1 // loop_footer
      %s16 = sadd.s32 1, %s12
    $region7: #{tpu_custom_call.1} parent=1 // loop_footer_branch
      %11 = sbr.rel target = $region3
    $region8: #{tpu_custom_call.1} parent=1 // loop_exit
      _
    %2339 = vsyncpa [#allocation3], 1
    %s2340 = scalar_lea.sflag [#allocation3], 1
    %2341 = vsyncpa %s2340, 1
    %2342 = vsyncpa [#allocation4], 1
    %s2343 = scalar_lea.sflag [#allocation4], 1
    %2344 = vsyncpa %s2343, 1

</llo_original>
